<compile_context>
chip_gen: v6e
topology: v6e:2x2x1
jax: 0.10.0
libtpu: 0.0.40
codegen_flags: <defaults>
</compile_context>

<pallas_src>
import jax
import jax.numpy as jnp
from jax.experimental import pallas as pl
from jax.experimental.pallas import tpu as pltpu


def _patch_embed_kernel(x_ref, s_ref, w_ref, o_ref):
    """x_ref: (TB, C, H, W); s_ref: (p, hp, H); w_ref: (C, p, W, wp*E); o_ref: (TB, hp, wp*E)."""
    tb, n_chan = x_ref.shape[0], x_ref.shape[1]
    p, hp = s_ref.shape[0], s_ref.shape[1]
    n_out = w_ref.shape[-1]
    cd = w_ref.dtype  # compute dtype for the MXU (f32 or bf16)
    for t in range(tb):
        acc = jnp.zeros((hp, n_out), jnp.float32)
        for c in range(n_chan):
            xc = x_ref[t, c].astype(cd)  # (H, W)
            for kh in range(p):
                # rows[h, :] == x[t, c, h*p + kh, :]  (exact 0/1 selection matmul).
                rows = jnp.dot(
                    s_ref[kh], xc, preferred_element_type=jnp.float32
                ).astype(cd)  # (hp, W)
                # Block-diagonal weight maps (j*p + kw) lanes -> (j*E + e) lanes.
                acc = acc + jnp.dot(
                    rows, w_ref[c, kh], preferred_element_type=jnp.float32
                )  # (hp, wp*E)
        o_ref[t] = acc.astype(o_ref.dtype)


def patch_embed(x, weight, patch_size: int, *, block_b: int = 1, compute_dtype=None):
    """x: (B, C, H, W) NCHW; weight: (embed_dim, C, p, p). Returns (B, num_patches, embed_dim).

    block_b: images per grid step (must divide B); raise it to amortize per-step
             overhead for small images.
    compute_dtype: e.g. jnp.bfloat16 for the MXU-native path (accumulation stays f32).
    """
    B, C, H, W = x.shape
    E = weight.shape[0]
    p = int(patch_size)
    assert H % p == 0 and W % p == 0
    assert weight.shape == (E, C, p, p)
    hp, wp = H // p, W // p

    tb = int(block_b)
    assert B % tb == 0, "block_b must divide the batch size"

    cd = jnp.dtype(compute_dtype) if compute_dtype is not None else jnp.dtype(x.dtype)

    # 0/1 row-selection matrices: sel[kh, h, r] = 1 iff r == h*p + kh.
    r_idx = jnp.arange(H, dtype=jnp.int32)
    sel = (
        r_idx[None, None, :]
        == (
            jnp.arange(hp, dtype=jnp.int32)[None, :, None] * p
            + jnp.arange(p, dtype=jnp.int32)[:, None, None]
        )
    ).astype(cd)  # (p, hp, H)

    # Block-diagonal weight: wbig[c, kh, j*p + kw, j*E + e] = weight[e, c, kh, kw].
    w_t = jnp.transpose(weight, (1, 2, 3, 0)).astype(cd)  # (C, p, p, E)
    eye = jnp.eye(wp, dtype=cd)
    wbig = (
        eye[None, None, :, None, :, None] * w_t[:, :, None, :, None, :]
    ).reshape(C, p, W, wp * E)  # (C, p, W, wp*E)

    x_item = jnp.dtype(x.dtype).itemsize
    est_vmem = (
        2 * tb * C * H * W * x_item          # double-buffered input tile
        + 2 * tb * hp * wp * E * x_item      # double-buffered output tile
        + 2 * sel.size * cd.itemsize         # resident operands
        + 2 * wbig.size * cd.itemsize
    )
    vmem_limit = int(min(64 * 2**20, max(32 * 2**20, 2 * est_vmem)))

    out = pl.pallas_call(
        _patch_embed_kernel,
        out_shape=jax.ShapeDtypeStruct((B, hp, wp * E), x.dtype),
        grid=(B // tb,),
        in_specs=[
            pl.BlockSpec((tb, C, H, W), lambda i: (i, 0, 0, 0)),
            pl.BlockSpec((p, hp, H), lambda i: (0, 0, 0)),            # resident
            pl.BlockSpec((C, p, W, wp * E), lambda i: (0, 0, 0, 0)),  # resident
        ],
        out_specs=pl.BlockSpec((tb, hp, wp * E), lambda i: (i, 0, 0)),
        compiler_params=pltpu.CompilerParams(
            dimension_semantics=("parallel",),
            vmem_limit_bytes=vmem_limit,
        ),
        cost_estimate=pl.CostEstimate(
            flops=2 * B * hp * wp * E * C * p * p,
            transcendentals=0,
            bytes_accessed=(
                x.size * x_item
                + sel.size * cd.itemsize
                + wbig.size * cd.itemsize
                + B * hp * wp * E * x_item
            ),
        ),
    )(x, sel, wbig)

    # (B, hp, wp*E) -> (B, hp*wp, E): row-major compatible, free reshape.
    return out.reshape(B, hp * wp, E)


def patch_embed_reference(x, weight, patch_size: int):
    """Pure-JAX reference of the PyTorch forward (conv -> flatten(2) -> transpose(1,2))."""
    y = jax.lax.conv_general_dilated(
        x,
        weight,
        window_strides=(patch_size, patch_size),
        padding="VALID",
        dimension_numbers=("NCHW", "OIHW", "NCHW"),
        precision=jax.lax.Precision.HIGHEST,
    )  # (B, E, hp, wp)
    B, E, hp, wp = y.shape
    return jnp.transpose(y.reshape(B, E, hp * wp), (0, 2, 1))  # (B, num_patches, E)


if __name__ == "__main__":
    # Small shapes consistent with the module: img_size=16, patch_size=4,
    # in_chans=3, embed_dim=32, batch=2.
    B, C, IMG, P, E = 2, 3, 16, 4, 32

    key = jax.random.PRNGKey(0)
    kx, kw = jax.random.split(key)
    x = jax.random.normal(kx, (B, C, IMG, IMG), dtype=jnp.float32)
    fan_in = C * P * P
    bound = 1.0 / (fan_in ** 0.5)
    weight = jax.random.uniform(
        kw, (E, C, P, P), dtype=jnp.float32, minval=-bound, maxval=bound
    )

    ref = patch_embed_reference(x, weight, P)

    # f32 compute path (exact-ish).
    out = jax.block_until_ready(patch_embed(x, weight, P))
    assert out.shape == (B, (IMG // P) ** 2, E), out.shape
    assert jnp.allclose(out, ref, atol=1e-4, rtol=1e-4), "f32 mismatch vs conv reference"

    # bf16 MXU path (v6e/v7x-friendly); accumulation stays f32.
    out_bf16 = jax.block_until_ready(
        patch_embed(x, weight, P, compute_dtype=jnp.bfloat16)
    )
    assert out_bf16.shape == out.shape
    assert jnp.allclose(out_bf16, ref, atol=3e-2, rtol=3e-2), "bf16 mismatch vs conv reference"

    print("KERNEL_OK")
</pallas_src>

<mosaic_0001>
module attributes {stable_mosaic.version = 11 : i64} {
  func.func @_patch_embed_kernel(%arg0: i32, %arg1: memref<1x3x16x16xf32, #tpu.memory_space<vmem>>, %arg2: memref<4x4x16xf32, #tpu.memory_space<vmem>>, %arg3: memref<3x4x16x128xf32, #tpu.memory_space<vmem>>, %arg4: memref<1x4x128xf32, #tpu.memory_space<vmem>>) attributes {dimension_semantics = [#tpu.dimension_semantics<parallel>], iteration_bounds = array<i64: 2>, scalar_prefetch = 0 : i64, scratch_operands = 0 : i64, tpu.core_type = #tpu.core_type<tc>, window_params = [{transform_indices = @transform_0, window_bounds = array<i64: 1, 3, 16, 16>}, {pipeline_mode = #tpu.pipeline_mode<synchronous>, transform_indices = @transform_1, window_bounds = array<i64: 4, 4, 16>}, {pipeline_mode = #tpu.pipeline_mode<synchronous>, transform_indices = @transform_2, window_bounds = array<i64: 3, 4, 16, 128>}, {transform_indices = @transform_3, window_bounds = array<i64: 1, 4, 128>}]} {
    %cst = arith.constant 0.000000e+00 : f32
    %0 = vector.broadcast %cst : f32 to vector<4x128xf32>
    %c0 = arith.constant 0 : index
    %c0_0 = arith.constant 0 : index
    %c0_1 = arith.constant 0 : index
    %c0_2 = arith.constant 0 : index
    %1 = vector.load %arg1[%c0, %c0_0, %c0_1, %c0_2] : memref<1x3x16x16xf32, #tpu.memory_space<vmem>>, vector<1x1x16x16xf32>
    %2 = vector.shape_cast %1 : vector<1x1x16x16xf32> to vector<16x16xf32>
    %c0_3 = arith.constant 0 : index
    %c0_4 = arith.constant 0 : index
    %c0_5 = arith.constant 0 : index
    %3 = vector.load %arg2[%c0_3, %c0_4, %c0_5] : memref<4x4x16xf32, #tpu.memory_space<vmem>>, vector<1x4x16xf32>
    %4 = vector.shape_cast %3 : vector<1x4x16xf32> to vector<4x16xf32>
    %cst_6 = arith.constant dense<0.000000e+00> : vector<4x16xf32>
    %5 = tpu.matmul %4, %2, %cst_6 {dimension_numbers = #tpu.dot_dimension_numbers<[1], [0], [0], [1], [0, 0, 1, 1], [], []>} : vector<4x16xf32>, vector<16x16xf32>, vector<4x16xf32> -> vector<4x16xf32>
    %c0_7 = arith.constant 0 : index
    %c0_8 = arith.constant 0 : index
    %c0_9 = arith.constant 0 : index
    %c0_10 = arith.constant 0 : index
    %6 = vector.load %arg3[%c0_7, %c0_8, %c0_9, %c0_10] : memref<3x4x16x128xf32, #tpu.memory_space<vmem>>, vector<1x1x16x128xf32>
    %7 = vector.shape_cast %6 : vector<1x1x16x128xf32> to vector<16x128xf32>
    %cst_11 = arith.constant dense<0.000000e+00> : vector<4x128xf32>
    %8 = tpu.matmul %5, %7, %cst_11 {dimension_numbers = #tpu.dot_dimension_numbers<[1], [0], [0], [1], [0, 0, 1, 1], [], []>} : vector<4x16xf32>, vector<16x128xf32>, vector<4x128xf32> -> vector<4x128xf32>
    %9 = arith.addf %0, %8 : vector<4x128xf32>
    %c1 = arith.constant 1 : index
    %c0_12 = arith.constant 0 : index
    %c0_13 = arith.constant 0 : index
    %10 = vector.load %arg2[%c1, %c0_12, %c0_13] : memref<4x4x16xf32, #tpu.memory_space<vmem>>, vector<1x4x16xf32>
    %11 = vector.shape_cast %10 : vector<1x4x16xf32> to vector<4x16xf32>
    %cst_14 = arith.constant dense<0.000000e+00> : vector<4x16xf32>
    %12 = tpu.matmul %11, %2, %cst_14 {dimension_numbers = #tpu.dot_dimension_numbers<[1], [0], [0], [1], [0, 0, 1, 1], [], []>} : vector<4x16xf32>, vector<16x16xf32>, vector<4x16xf32> -> vector<4x16xf32>
    %c0_15 = arith.constant 0 : index
    %c1_16 = arith.constant 1 : index
    %c0_17 = arith.constant 0 : index
    %c0_18 = arith.constant 0 : index
    %13 = vector.load %arg3[%c0_15, %c1_16, %c0_17, %c0_18] : memref<3x4x16x128xf32, #tpu.memory_space<vmem>>, vector<1x1x16x128xf32>
    %14 = vector.shape_cast %13 : vector<1x1x16x128xf32> to vector<16x128xf32>
    %cst_19 = arith.constant dense<0.000000e+00> : vector<4x128xf32>
    %15 = tpu.matmul %12, %14, %cst_19 {dimension_numbers = #tpu.dot_dimension_numbers<[1], [0], [0], [1], [0, 0, 1, 1], [], []>} : vector<4x16xf32>, vector<16x128xf32>, vector<4x128xf32> -> vector<4x128xf32>
    %16 = arith.addf %9, %15 : vector<4x128xf32>
    %c2 = arith.constant 2 : index
    %c0_20 = arith.constant 0 : index
    %c0_21 = arith.constant 0 : index
    %17 = vector.load %arg2[%c2, %c0_20, %c0_21] : memref<4x4x16xf32, #tpu.memory_space<vmem>>, vector<1x4x16xf32>
    %18 = vector.shape_cast %17 : vector<1x4x16xf32> to vector<4x16xf32>
    %cst_22 = arith.constant dense<0.000000e+00> : vector<4x16xf32>
    %19 = tpu.matmul %18, %2, %cst_22 {dimension_numbers = #tpu.dot_dimension_numbers<[1], [0], [0], [1], [0, 0, 1, 1], [], []>} : vector<4x16xf32>, vector<16x16xf32>, vector<4x16xf32> -> vector<4x16xf32>
    %c0_23 = arith.constant 0 : index
    %c2_24 = arith.constant 2 : index
    %c0_25 = arith.constant 0 : index
    %c0_26 = arith.constant 0 : index
    %20 = vector.load %arg3[%c0_23, %c2_24, %c0_25, %c0_26] : memref<3x4x16x128xf32, #tpu.memory_space<vmem>>, vector<1x1x16x128xf32>
    %21 = vector.shape_cast %20 : vector<1x1x16x128xf32> to vector<16x128xf32>
    %cst_27 = arith.constant dense<0.000000e+00> : vector<4x128xf32>
    %22 = tpu.matmul %19, %21, %cst_27 {dimension_numbers = #tpu.dot_dimension_numbers<[1], [0], [0], [1], [0, 0, 1, 1], [], []>} : vector<4x16xf32>, vector<16x128xf32>, vector<4x128xf32> -> vector<4x128xf32>
    %23 = arith.addf %16, %22 : vector<4x128xf32>
    %c3 = arith.constant 3 : index
    %c0_28 = arith.constant 0 : index
    %c0_29 = arith.constant 0 : index
    %24 = vector.load %arg2[%c3, %c0_28, %c0_29] : memref<4x4x16xf32, #tpu.memory_space<vmem>>, vector<1x4x16xf32>
    %25 = vector.shape_cast %24 : vector<1x4x16xf32> to vector<4x16xf32>
    %cst_30 = arith.constant dense<0.000000e+00> : vector<4x16xf32>
    %26 = tpu.matmul %25, %2, %cst_30 {dimension_numbers = #tpu.dot_dimension_numbers<[1], [0], [0], [1], [0, 0, 1, 1], [], []>} : vector<4x16xf32>, vector<16x16xf32>, vector<4x16xf32> -> vector<4x16xf32>
    %c0_31 = arith.constant 0 : index
    %c3_32 = arith.constant 3 : index
    %c0_33 = arith.constant 0 : index
    %c0_34 = arith.constant 0 : index
    %27 = vector.load %arg3[%c0_31, %c3_32, %c0_33, %c0_34] : memref<3x4x16x128xf32, #tpu.memory_space<vmem>>, vector<1x1x16x128xf32>
    %28 = vector.shape_cast %27 : vector<1x1x16x128xf32> to vector<16x128xf32>
    %cst_35 = arith.constant dense<0.000000e+00> : vector<4x128xf32>
    %29 = tpu.matmul %26, %28, %cst_35 {dimension_numbers = #tpu.dot_dimension_numbers<[1], [0], [0], [1], [0, 0, 1, 1], [], []>} : vector<4x16xf32>, vector<16x128xf32>, vector<4x128xf32> -> vector<4x128xf32>
    %30 = arith.addf %23, %29 : vector<4x128xf32>
    %c0_36 = arith.constant 0 : index
    %c1_37 = arith.constant 1 : index
    %c0_38 = arith.constant 0 : index
    %c0_39 = arith.constant 0 : index
    %31 = vector.load %arg1[%c0_36, %c1_37, %c0_38, %c0_39] : memref<1x3x16x16xf32, #tpu.memory_space<vmem>>, vector<1x1x16x16xf32>
    %32 = vector.shape_cast %31 : vector<1x1x16x16xf32> to vector<16x16xf32>
    %c0_40 = arith.constant 0 : index
    %c0_41 = arith.constant 0 : index
    %c0_42 = arith.constant 0 : index
    %33 = vector.load %arg2[%c0_40, %c0_41, %c0_42] : memref<4x4x16xf32, #tpu.memory_space<vmem>>, vector<1x4x16xf32>
    %34 = vector.shape_cast %33 : vector<1x4x16xf32> to vector<4x16xf32>
    %cst_43 = arith.constant dense<0.000000e+00> : vector<4x16xf32>
    %35 = tpu.matmul %34, %32, %cst_43 {dimension_numbers = #tpu.dot_dimension_numbers<[1], [0], [0], [1], [0, 0, 1, 1], [], []>} : vector<4x16xf32>, vector<16x16xf32>, vector<4x16xf32> -> vector<4x16xf32>
    %c1_44 = arith.constant 1 : index
    %c0_45 = arith.constant 0 : index
    %c0_46 = arith.constant 0 : index
    %c0_47 = arith.constant 0 : index
    %36 = vector.load %arg3[%c1_44, %c0_45, %c0_46, %c0_47] : memref<3x4x16x128xf32, #tpu.memory_space<vmem>>, vector<1x1x16x128xf32>
    %37 = vector.shape_cast %36 : vector<1x1x16x128xf32> to vector<16x128xf32>
    %cst_48 = arith.constant dense<0.000000e+00> : vector<4x128xf32>
    %38 = tpu.matmul %35, %37, %cst_48 {dimension_numbers = #tpu.dot_dimension_numbers<[1], [0], [0], [1], [0, 0, 1, 1], [], []>} : vector<4x16xf32>, vector<16x128xf32>, vector<4x128xf32> -> vector<4x128xf32>
    %39 = arith.addf %30, %38 : vector<4x128xf32>
    %c1_49 = arith.constant 1 : index
    %c0_50 = arith.constant 0 : index
    %c0_51 = arith.constant 0 : index
    %40 = vector.load %arg2[%c1_49, %c0_50, %c0_51] : memref<4x4x16xf32, #tpu.memory_space<vmem>>, vector<1x4x16xf32>
    %41 = vector.shape_cast %40 : vector<1x4x16xf32> to vector<4x16xf32>
    %cst_52 = arith.constant dense<0.000000e+00> : vector<4x16xf32>
    %42 = tpu.matmul %41, %32, %cst_52 {dimension_numbers = #tpu.dot_dimension_numbers<[1], [0], [0], [1], [0, 0, 1, 1], [], []>} : vector<4x16xf32>, vector<16x16xf32>, vector<4x16xf32> -> vector<4x16xf32>
    %c1_53 = arith.constant 1 : index
    %c1_54 = arith.constant 1 : index
    %c0_55 = arith.constant 0 : index
    %c0_56 = arith.constant 0 : index
    %43 = vector.load %arg3[%c1_53, %c1_54, %c0_55, %c0_56] : memref<3x4x16x128xf32, #tpu.memory_space<vmem>>, vector<1x1x16x128xf32>
    %44 = vector.shape_cast %43 : vector<1x1x16x128xf32> to vector<16x128xf32>
    %cst_57 = arith.constant dense<0.000000e+00> : vector<4x128xf32>
    %45 = tpu.matmul %42, %44, %cst_57 {dimension_numbers = #tpu.dot_dimension_numbers<[1], [0], [0], [1], [0, 0, 1, 1], [], []>} : vector<4x16xf32>, vector<16x128xf32>, vector<4x128xf32> -> vector<4x128xf32>
    %46 = arith.addf %39, %45 : vector<4x128xf32>
    %c2_58 = arith.constant 2 : index
    %c0_59 = arith.constant 0 : index
    %c0_60 = arith.constant 0 : index
    %47 = vector.load %arg2[%c2_58, %c0_59, %c0_60] : memref<4x4x16xf32, #tpu.memory_space<vmem>>, vector<1x4x16xf32>
    %48 = vector.shape_cast %47 : vector<1x4x16xf32> to vector<4x16xf32>
    %cst_61 = arith.constant dense<0.000000e+00> : vector<4x16xf32>
    %49 = tpu.matmul %48, %32, %cst_61 {dimension_numbers = #tpu.dot_dimension_numbers<[1], [0], [0], [1], [0, 0, 1, 1], [], []>} : vector<4x16xf32>, vector<16x16xf32>, vector<4x16xf32> -> vector<4x16xf32>
    %c1_62 = arith.constant 1 : index
    %c2_63 = arith.constant 2 : index
    %c0_64 = arith.constant 0 : index
    %c0_65 = arith.constant 0 : index
    %50 = vector.load %arg3[%c1_62, %c2_63, %c0_64, %c0_65] : memref<3x4x16x128xf32, #tpu.memory_space<vmem>>, vector<1x1x16x128xf32>
    %51 = vector.shape_cast %50 : vector<1x1x16x128xf32> to vector<16x128xf32>
    %cst_66 = arith.constant dense<0.000000e+00> : vector<4x128xf32>
    %52 = tpu.matmul %49, %51, %cst_66 {dimension_numbers = #tpu.dot_dimension_numbers<[1], [0], [0], [1], [0, 0, 1, 1], [], []>} : vector<4x16xf32>, vector<16x128xf32>, vector<4x128xf32> -> vector<4x128xf32>
    %53 = arith.addf %46, %52 : vector<4x128xf32>
    %c3_67 = arith.constant 3 : index
    %c0_68 = arith.constant 0 : index
    %c0_69 = arith.constant 0 : index
    %54 = vector.load %arg2[%c3_67, %c0_68, %c0_69] : memref<4x4x16xf32, #tpu.memory_space<vmem>>, vector<1x4x16xf32>
    %55 = vector.shape_cast %54 : vector<1x4x16xf32> to vector<4x16xf32>
    %cst_70 = arith.constant dense<0.000000e+00> : vector<4x16xf32>
    %56 = tpu.matmul %55, %32, %cst_70 {dimension_numbers = #tpu.dot_dimension_numbers<[1], [0], [0], [1], [0, 0, 1, 1], [], []>} : vector<4x16xf32>, vector<16x16xf32>, vector<4x16xf32> -> vector<4x16xf32>
    %c1_71 = arith.constant 1 : index
    %c3_72 = arith.constant 3 : index
    %c0_73 = arith.constant 0 : index
    %c0_74 = arith.constant 0 : index
    %57 = vector.load %arg3[%c1_71, %c3_72, %c0_73, %c0_74] : memref<3x4x16x128xf32, #tpu.memory_space<vmem>>, vector<1x1x16x128xf32>
    %58 = vector.shape_cast %57 : vector<1x1x16x128xf32> to vector<16x128xf32>
    %cst_75 = arith.constant dense<0.000000e+00> : vector<4x128xf32>
    %59 = tpu.matmul %56, %58, %cst_75 {dimension_numbers = #tpu.dot_dimension_numbers<[1], [0], [0], [1], [0, 0, 1, 1], [], []>} : vector<4x16xf32>, vector<16x128xf32>, vector<4x128xf32> -> vector<4x128xf32>
    %60 = arith.addf %53, %59 : vector<4x128xf32>
    %c0_76 = arith.constant 0 : index
    %c2_77 = arith.constant 2 : index
    %c0_78 = arith.constant 0 : index
    %c0_79 = arith.constant 0 : index
    %61 = vector.load %arg1[%c0_76, %c2_77, %c0_78, %c0_79] : memref<1x3x16x16xf32, #tpu.memory_space<vmem>>, vector<1x1x16x16xf32>
    %62 = vector.shape_cast %61 : vector<1x1x16x16xf32> to vector<16x16xf32>
    %c0_80 = arith.constant 0 : index
    %c0_81 = arith.constant 0 : index
    %c0_82 = arith.constant 0 : index
    %63 = vector.load %arg2[%c0_80, %c0_81, %c0_82] : memref<4x4x16xf32, #tpu.memory_space<vmem>>, vector<1x4x16xf32>
    %64 = vector.shape_cast %63 : vector<1x4x16xf32> to vector<4x16xf32>
    %cst_83 = arith.constant dense<0.000000e+00> : vector<4x16xf32>
    %65 = tpu.matmul %64, %62, %cst_83 {dimension_numbers = #tpu.dot_dimension_numbers<[1], [0], [0], [1], [0, 0, 1, 1], [], []>} : vector<4x16xf32>, vector<16x16xf32>, vector<4x16xf32> -> vector<4x16xf32>
    %c2_84 = arith.constant 2 : index
    %c0_85 = arith.constant 0 : index
    %c0_86 = arith.constant 0 : index
    %c0_87 = arith.constant 0 : index
    %66 = vector.load %arg3[%c2_84, %c0_85, %c0_86, %c0_87] : memref<3x4x16x128xf32, #tpu.memory_space<vmem>>, vector<1x1x16x128xf32>
    %67 = vector.shape_cast %66 : vector<1x1x16x128xf32> to vector<16x128xf32>
    %cst_88 = arith.constant dense<0.000000e+00> : vector<4x128xf32>
    %68 = tpu.matmul %65, %67, %cst_88 {dimension_numbers = #tpu.dot_dimension_numbers<[1], [0], [0], [1], [0, 0, 1, 1], [], []>} : vector<4x16xf32>, vector<16x128xf32>, vector<4x128xf32> -> vector<4x128xf32>
    %69 = arith.addf %60, %68 : vector<4x128xf32>
    %c1_89 = arith.constant 1 : index
    %c0_90 = arith.constant 0 : index
    %c0_91 = arith.constant 0 : index
    %70 = vector.load %arg2[%c1_89, %c0_90, %c0_91] : memref<4x4x16xf32, #tpu.memory_space<vmem>>, vector<1x4x16xf32>
    %71 = vector.shape_cast %70 : vector<1x4x16xf32> to vector<4x16xf32>
    %cst_92 = arith.constant dense<0.000000e+00> : vector<4x16xf32>
    %72 = tpu.matmul %71, %62, %cst_92 {dimension_numbers = #tpu.dot_dimension_numbers<[1], [0], [0], [1], [0, 0, 1, 1], [], []>} : vector<4x16xf32>, vector<16x16xf32>, vector<4x16xf32> -> vector<4x16xf32>
    %c2_93 = arith.constant 2 : index
    %c1_94 = arith.constant 1 : index
    %c0_95 = arith.constant 0 : index
    %c0_96 = arith.constant 0 : index
    %73 = vector.load %arg3[%c2_93, %c1_94, %c0_95, %c0_96] : memref<3x4x16x128xf32, #tpu.memory_space<vmem>>, vector<1x1x16x128xf32>
    %74 = vector.shape_cast %73 : vector<1x1x16x128xf32> to vector<16x128xf32>
    %cst_97 = arith.constant dense<0.000000e+00> : vector<4x128xf32>
    %75 = tpu.matmul %72, %74, %cst_97 {dimension_numbers = #tpu.dot_dimension_numbers<[1], [0], [0], [1], [0, 0, 1, 1], [], []>} : vector<4x16xf32>, vector<16x128xf32>, vector<4x128xf32> -> vector<4x128xf32>
    %76 = arith.addf %69, %75 : vector<4x128xf32>
    %c2_98 = arith.constant 2 : index
    %c0_99 = arith.constant 0 : index
    %c0_100 = arith.constant 0 : index
    %77 = vector.load %arg2[%c2_98, %c0_99, %c0_100] : memref<4x4x16xf32, #tpu.memory_space<vmem>>, vector<1x4x16xf32>
    %78 = vector.shape_cast %77 : vector<1x4x16xf32> to vector<4x16xf32>
    %cst_101 = arith.constant dense<0.000000e+00> : vector<4x16xf32>
    %79 = tpu.matmul %78, %62, %cst_101 {dimension_numbers = #tpu.dot_dimension_numbers<[1], [0], [0], [1], [0, 0, 1, 1], [], []>} : vector<4x16xf32>, vector<16x16xf32>, vector<4x16xf32> -> vector<4x16xf32>
    %c2_102 = arith.constant 2 : index
    %c2_103 = arith.constant 2 : index
    %c0_104 = arith.constant 0 : index
    %c0_105 = arith.constant 0 : index
    %80 = vector.load %arg3[%c2_102, %c2_103, %c0_104, %c0_105] : memref<3x4x16x128xf32, #tpu.memory_space<vmem>>, vector<1x1x16x128xf32>
    %81 = vector.shape_cast %80 : vector<1x1x16x128xf32> to vector<16x128xf32>
    %cst_106 = arith.constant dense<0.000000e+00> : vector<4x128xf32>
    %82 = tpu.matmul %79, %81, %cst_106 {dimension_numbers = #tpu.dot_dimension_numbers<[1], [0], [0], [1], [0, 0, 1, 1], [], []>} : vector<4x16xf32>, vector<16x128xf32>, vector<4x128xf32> -> vector<4x128xf32>
    %83 = arith.addf %76, %82 : vector<4x128xf32>
    %c3_107 = arith.constant 3 : index
    %c0_108 = arith.constant 0 : index
    %c0_109 = arith.constant 0 : index
    %84 = vector.load %arg2[%c3_107, %c0_108, %c0_109] : memref<4x4x16xf32, #tpu.memory_space<vmem>>, vector<1x4x16xf32>
    %85 = vector.shape_cast %84 : vector<1x4x16xf32> to vector<4x16xf32>
    %cst_110 = arith.constant dense<0.000000e+00> : vector<4x16xf32>
    %86 = tpu.matmul %85, %62, %cst_110 {dimension_numbers = #tpu.dot_dimension_numbers<[1], [0], [0], [1], [0, 0, 1, 1], [], []>} : vector<4x16xf32>, vector<16x16xf32>, vector<4x16xf32> -> vector<4x16xf32>
    %c2_111 = arith.constant 2 : index
    %c3_112 = arith.constant 3 : index
    %c0_113 = arith.constant 0 : index
    %c0_114 = arith.constant 0 : index
    %87 = vector.load %arg3[%c2_111, %c3_112, %c0_113, %c0_114] : memref<3x4x16x128xf32, #tpu.memory_space<vmem>>, vector<1x1x16x128xf32>
    %88 = vector.shape_cast %87 : vector<1x1x16x128xf32> to vector<16x128xf32>
    %cst_115 = arith.constant dense<0.000000e+00> : vector<4x128xf32>
    %89 = tpu.matmul %86, %88, %cst_115 {dimension_numbers = #tpu.dot_dimension_numbers<[1], [0], [0], [1], [0, 0, 1, 1], [], []>} : vector<4x16xf32>, vector<16x128xf32>, vector<4x128xf32> -> vector<4x128xf32>
    %90 = arith.addf %83, %89 : vector<4x128xf32>
    %c0_116 = arith.constant 0 : index
    %c0_117 = arith.constant 0 : index
    %c0_118 = arith.constant 0 : index
    %91 = vector.load %arg4[%c0_116, %c0_117, %c0_118] : memref<1x4x128xf32, #tpu.memory_space<vmem>>, vector<1x4x128xf32>
    %92 = vector.shape_cast %91 : vector<1x4x128xf32> to vector<4x128xf32>
    %93 = vector.shape_cast %90 : vector<4x128xf32> to vector<1x4x128xf32>
    tpu.vector_store %arg4[%c0_116, %c0_117, %c0_118], %93 {strides = array<i32>} : memref<1x4x128xf32, #tpu.memory_space<vmem>>, vector<1x4x128xf32>,
    return
  }
  func.func @transform_0(%arg0: i32) -> (i32, i32, i32, i32) {
    %c0_i32 = arith.constant 0 : i32
    %c0_i32_0 = arith.constant 0 : i32
    %c0_i32_1 = arith.constant 0 : i32
    %c0_i32_2 = arith.constant 0 : i32
    return %arg0, %c0_i32, %c0_i32_0, %c0_i32_1 : i32, i32, i32, i32
  }
  func.func @transform_1(%arg0: i32) -> (i32, i32, i32) {
    %c0_i32 = arith.constant 0 : i32
    %c0_i32_0 = arith.constant 0 : i32
    %c0_i32_1 = arith.constant 0 : i32
    %c0_i32_2 = arith.constant 0 : i32
    return %c0_i32, %c0_i32_0, %c0_i32_1 : i32, i32, i32
  }
  func.func @transform_2(%arg0: i32) -> (i32, i32, i32, i32) {
    %c0_i32 = arith.constant 0 : i32
    %c0_i32_0 = arith.constant 0 : i32
    %c0_i32_1 = arith.constant 0 : i32
    %c0_i32_2 = arith.constant 0 : i32
    %c0_i32_3 = arith.constant 0 : i32
    return %c0_i32, %c0_i32_0, %c0_i32_1, %c0_i32_2 : i32, i32, i32, i32
  }
  func.func @transform_3(%arg0: i32) -> (i32, i32, i32) {
    %c0_i32 = arith.constant 0 : i32
    %c0_i32_0 = arith.constant 0 : i32
    %c0_i32_1 = arith.constant 0 : i32
    return %arg0, %c0_i32, %c0_i32_0 : i32, i32, i32
  }
}

</mosaic_0001>

<llo_original>
// kernel: tpu_custom_call.1
$region0: #{tpu_custom_call.1}
  #allocation0 [shape = 'u32[]', space=smem, size = 0x4, offset = 0x4, fixed_abs, tag = 'smem constant byte address 0x4 - core index']
  #allocation1 [shape = 'u32[144,128]{1,0:T(1,128)}', space=vmem, size = 0x12000, scoped, tag = 'internal scratch']
  %s0 = inlined_call_operand.hbm [shape: f32[2,3,16,16], index: 0, kind: input, shape index: {}]
  %s1 = inlined_call_operand.hbm [shape: f32[4,4,16], index: 1, kind: input, shape index: {}]
  %s2 = inlined_call_operand.hbm [shape: f32[3,4,16,128], index: 2, kind: input, shape index: {}]
  %s3 = inlined_call_operand.hbm [shape: f32[2,4,128], index: 3, kind: output, shape index: {}]
  %s4 = sld [smem:[#allocation0]]
  $region57: #{tpu_custom_call.1} parent=0
    _
  %s6 = ssub.s32 1, %s4
  %s7 = scalar_select 0, %s6, %s4
  $region1: #{tpu_custom_call.1} parent=0
    #allocation2 [shape = 'u8[49152]{0}', space=vmem, size = 0xc000, scoped, tag = 'input window, operand 0']
    #allocation3 [shape = 's32[2]{0}', space=sflag, size = 0x8, scoped, tag = 'scoped memory for tpu_custom_call.1']
    #allocation4 [shape = 's32[2]{0}', space=sflag, size = 0x8, scoped, tag = 'scoped memory for tpu_custom_call.1']
    #allocation5 [shape = 'u8[8192]{0}', space=vmem, size = 0x2000, scoped, tag = 'input window, operand 1, single buffered']
    #allocation6 [shape = 's32[1]{0}', space=sflag, size = 0x4, scoped, tag = 'scoped memory for tpu_custom_call.1']
    #allocation7 [shape = 'u8[98304]{0}', space=vmem, size = 0x18000, scoped, tag = 'input window, operand 2, single buffered']
    #allocation8 [shape = 'u8[4096]{0}', space=vmem, size = 0x1000, scoped, tag = 'output window, operand 0']
    %8 = vsyncpa [#allocation3], 0
    %s9 = scalar_lea.sflag [#allocation3], 1
    %10 = vsyncpa %s9, 0
    %11 = vsyncpa [#allocation6], 0
    %12 = vsyncpa [#allocation4], 0
    %s13 = scalar_lea.sflag [#allocation4], 1
    %14 = vsyncpa %s13, 0
    loop: start=0, step=1, limit=4
    $region2: #{tpu_custom_call.1} parent=1 // loop_pre_header
      _
    $region3: #{tpu_custom_call.1} parent=1 // loop_header
      %s16 = sphi 0, %s20
      %p17 = scmp.ge.s32.totalorder %s16, 4
      %s26 = sphi 0, %s28
      %s29 = sphi 0, %s26
      %s30 = sphi 0, %s29
      %s46 = sphi 0, %s30
      %s50 = sphi 0, %s50
      %s52 = sphi 0, %s50
      %s53 = sphi 0, %s52
      %s67 = sphi 0, %s53
      %s71 = sphi 0, %s71
      %s73 = sphi 0, %s71
      %s74 = sphi 0, %s73
      %s88 = sphi 0, %s74
      %s94 = sphi 0, %s96
      %s97 = sphi 0, %s94
      %s98 = sphi 0, %s97
      %s114 = sphi 0, %s98
    $region4: #{tpu_custom_call.1} parent=1 // loop_header_branch
      %19 = sbr.rel (%p17) target = $region8
    $region5: #{tpu_custom_call.1} parent=1 // loop_body
      %s21 = ssub.s32 %s16, 1
      %s22 = ssub.s32 %s16, 2
      %s23 = sadd.s32 %s16, 1
      %s24 = ssub.s32 %s16, %s23
      %p25 = scmp.eq.s32.totalorder %s24, 0
      %s27 = sadd.s32 %s26, 1
      %s28 = scalar_select %p25, %s26, %s27
      %p31 = pneg %p25
      %p32 = scmp.eq.s32.totalorder %s16, 1
      %p33 = por %p31, %p32
      %p34 = scmp.ne.s32.totalorder %s26, %s29
      %p35 = scmp.eq.s32.totalorder %s16, 0
      %p36 = por %p34, %p35
      %p37 = scmp.ne.s32.totalorder %s26, %s29
      %p38 = scmp.eq.s32.totalorder %s21, 1
      %p39 = por %p37, %p38
      %p40 = scmp.ne.s32.totalorder %s29, %s30
      %p41 = scmp.eq.s32.totalorder %s21, 0
      %p42 = por %p40, %p41
      %p43 = scmp.ne.s32.totalorder %s29, %s30
      %p44 = scmp.eq.s32.totalorder %s22, 1
      %p45 = por %p43, %p44
      %p47 = scmp.ne.s32.totalorder %s30, %s46
      %p48 = scmp.eq.s32.totalorder %s22, 0
      %p49 = por %p47, %p48
      %s51 = sadd.s32 %s50, 1
      %p54 = scmp.eq.s32.totalorder %s16, 1
      %p55 = scmp.ne.s32.totalorder %s50, %s52
      %p56 = scmp.eq.s32.totalorder %s16, 0
      %p57 = por %p55, %p56
      %p58 = scmp.ne.s32.totalorder %s50, %s52
      %p59 = scmp.eq.s32.totalorder %s21, 1
      %p60 = por %p58, %p59
      %p61 = scmp.ne.s32.totalorder %s52, %s53
      %p62 = scmp.eq.s32.totalorder %s21, 0
      %p63 = por %p61, %p62
      %p64 = scmp.ne.s32.totalorder %s52, %s53
      %p65 = scmp.eq.s32.totalorder %s22, 1
      %p66 = por %p64, %p65
      %p68 = scmp.ne.s32.totalorder %s53, %s67
      %p69 = scmp.eq.s32.totalorder %s22, 0
      %p70 = por %p68, %p69
      %s72 = sadd.s32 %s71, 1
      %p75 = scmp.eq.s32.totalorder %s16, 1
      %p76 = scmp.ne.s32.totalorder %s71, %s73
      %p77 = scmp.eq.s32.totalorder %s16, 0
      %p78 = por %p76, %p77
      %p79 = scmp.ne.s32.totalorder %s71, %s73
      %p80 = scmp.eq.s32.totalorder %s21, 1
      %p81 = por %p79, %p80
      %p82 = scmp.ne.s32.totalorder %s73, %s74
      %p83 = scmp.eq.s32.totalorder %s21, 0
      %p84 = por %p82, %p83
      %p85 = scmp.ne.s32.totalorder %s73, %s74
      %p86 = scmp.eq.s32.totalorder %s22, 1
      %p87 = por %p85, %p86
      %p89 = scmp.ne.s32.totalorder %s74, %s88
      %p90 = scmp.eq.s32.totalorder %s22, 0
      %p91 = por %p89, %p90
      %s92 = ssub.s32 %s16, %s23
      %p93 = scmp.eq.s32.totalorder %s92, 0
      %s95 = sadd.s32 %s94, 1
      %s96 = scalar_select %p93, %s94, %s95
      %p99 = pneg %p93
      %p100 = scmp.eq.s32.totalorder %s16, 1
      %p101 = por %p99, %p100
      %p102 = scmp.ne.s32.totalorder %s94, %s97
      %p103 = scmp.eq.s32.totalorder %s16, 0
      %p104 = por %p102, %p103
      %p105 = scmp.ne.s32.totalorder %s94, %s97
      %p106 = scmp.eq.s32.totalorder %s21, 1
      %p107 = por %p105, %p106
      %p108 = scmp.ne.s32.totalorder %s97, %s98
      %p109 = scmp.eq.s32.totalorder %s21, 0
      %p110 = por %p108, %p109
      %p111 = scmp.ne.s32.totalorder %s97, %s98
      %p112 = scmp.eq.s32.totalorder %s22, 1
      %p113 = por %p111, %p112
      %p115 = scmp.ne.s32.totalorder %s98, %s114
      %p116 = scmp.eq.s32.totalorder %s22, 0
      %p117 = por %p115, %p116
      %p118 = scmp.le.s32.totalorder 1, %s16
      %p119 = scmp.lt.s32.totalorder %s16, 3
      %p120 = pnand %p118, %p119
      %p121 = pneg %p120
      // Predicated region
      $region9: #{tpu_custom_call.1} parent=5 // pred_check
        _
      $region10: #{tpu_custom_call.1} parent=5 // pred_check_branch
        %123 = sbr.rel (%p120) target = $region12
      $region11: #{tpu_custom_call.1} parent=5 // pred_region
        %s124 = ssub.s32 %s16, 1
        // Predicated region
        $region13: #{tpu_custom_call.1} parent=11 // pred_check
          %p125 = pneg %p63
        $region14: #{tpu_custom_call.1} parent=11 // pred_check_branch
          %127 = sbr.rel (%p125) target = $region16
        $region15: #{tpu_custom_call.1} parent=11 // pred_region
          %s129 = ssub.s32 256, 256
          %130 = vsyncadd [#allocation6], %s129
          %s131 = sshll.u32 [#allocation5], 4
          %s132 = int_to_ptr.vmem [resolvable:$true] %s131
          %137 = dma.hbm_to_vmem [thread:$0]  %s1, 256, %s132, [#allocation6], 64, 64, 4
        $region16: #{tpu_custom_call.1} parent=11 // pred_fallthru
          _
        // Predicated region
        $region17: #{tpu_custom_call.1} parent=11 // pred_check
          %p138 = pneg %p84
        $region18: #{tpu_custom_call.1} parent=11 // pred_check_branch
          %140 = sbr.rel (%p138) target = $region20
        $region19: #{tpu_custom_call.1} parent=11 // pred_region
          %s142 = ssub.s32 3072, 3072
          %143 = vsyncadd [#allocation6], %s142
          %s144 = sshll.u32 [#allocation7], 4
          %s145 = int_to_ptr.vmem [resolvable:$true] %s144
          %150 = dma.hbm_to_vmem [thread:$0]  %s2, 3072, %s145, [#allocation6], 128, 128, 8
        $region20: #{tpu_custom_call.1} parent=11 // pred_fallthru
          _
      $region12: #{tpu_custom_call.1} parent=5 // pred_fallthru
        _
      %p151 = scmp.lt.s32.totalorder %s16, 2
      // Predicated region
      $region21: #{tpu_custom_call.1} parent=5 // pred_check
        %p152 = pneg %p151
      $region22: #{tpu_custom_call.1} parent=5 // pred_check_branch
        %154 = sbr.rel (%p152) target = $region24
      $region23: #{tpu_custom_call.1} parent=5 // pred_region
        // Predicated region
        $region25: #{tpu_custom_call.1} parent=23 // pred_check
          %p155 = pneg %p36
        $region26: #{tpu_custom_call.1} parent=23 // pred_check_branch
          %157 = sbr.rel (%p155) target = $region28
        $region27: #{tpu_custom_call.1} parent=23 // pred_region
          %s158 = sand.u32 %s26, 1
          %s159 = scalar_lea.sflag [#allocation3], %s158
          %s160 = sand.u32 %s26, 1
          %s161 = smul.addr %s160, 48
          %s162 = scalar_lea.vmem [#allocation2], %s161
          %s164 = ssub.s32 768, 768
          %165 = vsyncadd %s159, %s164
          %s166 = smul.addr %s16, 6
          %s167 = smul.addr %s166, 128
          %s168 = scalar_lea.hbm %s0, %s167
          %s169 = sshll.u32 %s162, 4
          %s170 = int_to_ptr.vmem [resolvable:$true] %s169
          %175 = dma.hbm_to_vmem [thread:$0]  %s168, 768, %s170, %s159, 128, 128, 8
        $region28: #{tpu_custom_call.1} parent=23 // pred_fallthru
          _
      $region24: #{tpu_custom_call.1} parent=5 // pred_fallthru
        _
      %p176 = scmp.le.s32.totalorder 1, %s16
      %p177 = scmp.lt.s32.totalorder %s16, 3
      %p178 = pnand %p176, %p177
      %p179 = pneg %p178
      // Predicated region
      $region29: #{tpu_custom_call.1} parent=5 // pred_check
        _
      $region30: #{tpu_custom_call.1} parent=5 // pred_check_branch
        %181 = sbr.rel (%p178) target = $region32
      $region31: #{tpu_custom_call.1} parent=5 // pred_region
        %s182 = ssub.s32 %s16, 1
        %s183 = sand.u32 %s29, 1
        %s184 = scalar_lea.sflag [#allocation3], %s183
        %s185 = sand.u32 %s29, 1
        %s186 = smul.addr %s185, 48
        %s187 = scalar_lea.vmem [#allocation2], %s186
        // Predicated region
        $region33: #{tpu_custom_call.1} parent=31 // pred_check
          %p188 = pneg %p42
        $region34: #{tpu_custom_call.1} parent=31 // pred_check_branch
          %190 = sbr.rel (%p188) target = $region36
        $region35: #{tpu_custom_call.1} parent=31 // pred_region
          %191 = dma.done %s184, 768
        $region36: #{tpu_custom_call.1} parent=31 // pred_fallthru
          _
        // Predicated region
        $region37: #{tpu_custom_call.1} parent=31 // pred_check
          %p192 = pneg %p63
        $region38: #{tpu_custom_call.1} parent=31 // pred_check_branch
          %194 = sbr.rel (%p192) target = $region40
        $region39: #{tpu_custom_call.1} parent=31 // pred_region
          %195 = dma.done [#allocation6], 256
        $region40: #{tpu_custom_call.1} parent=31 // pred_fallthru
          _
        // Predicated region
        $region41: #{tpu_custom_call.1} parent=31 // pred_check
          %p196 = pneg %p84
        $region42: #{tpu_custom_call.1} parent=31 // pred_check_branch
          %198 = sbr.rel (%p196) target = $region44
        $region43: #{tpu_custom_call.1} parent=31 // pred_region
          %199 = dma.done [#allocation6], 3072
        $region44: #{tpu_custom_call.1} parent=31 // pred_fallthru
          _
        %s200 = sand.u32 %s29, 1
        %s201 = scalar_lea.sflag [#allocation3], %s200
        %s202 = sand.u32 %s29, 1
        %s203 = smul.addr %s202, 48
        %s204 = scalar_lea.vmem [#allocation2], %s203
        %p205 = pneg %p42
        %p206 = pneg %p39
        %p207 = pneg %p63
        %p208 = pneg %p60
        %p209 = pneg %p84
        %p210 = pneg %p81
        %p211 = pneg %p110
        %p212 = pneg %p107
        %s213 = sand.u32 %s97, 1
        %s214 = scalar_lea.sflag [#allocation4], %s213
        %s215 = sand.u32 %s97, 1
        %s216 = smul.addr %s215, 4
        %s217 = scalar_lea.vmem [#allocation8], %s216
        %v218 = vld [vmem:[%s187] sm:$0xff]
        %v219 = vld [vmem:[%s187 + $0x8] sm:$0xff]
        %v220 = vld [vmem:[#allocation5] sm:$0xf]
        %vm221 = vcmask 130048
        %v223 = vsel %vm221, %v220, 0
        %225 = vmatprep.subr.mxu0 0.0
        %226 = vmatpush1.msra.mxu0 0.0
        %227 = vmatprep.subr.mxu0 0.0
        %228 = vmatpush1.msra.mxu0 0.0
        %229 = vmatprep.subr.mxu0 0.0
        %230 = vmatpush1.msra.mxu0 0.0
        %231 = vmatprep.subr.mxu0 0.0
        %232 = vmatpush1.msra.mxu0 0.0
        %233 = vmatprep.subr.mxu0 0.0
        %234 = vmatpush1.msra.mxu0 0.0
        %235 = vmatprep.subr.mxu0 0.0
        %236 = vmatpush1.msra.mxu0 0.0
        %237 = vmatprep.subr.mxu0 0.0
        %238 = vmatpush1.msra.mxu0 0.0
        %239 = vmatprep.subr.mxu0 0.0
        %240 = vmatpush1.msra.mxu0 0.0
        %241 = vmatprep.subr.mxu0 0.0
        %242 = vmatpush1.msra.mxu0 0.0
        %243 = vmatprep.subr.mxu0 0.0
        %244 = vmatpush1.msra.mxu0 0.0
        %245 = vmatprep.subr.mxu0 0.0
        %246 = vmatpush1.msra.mxu0 0.0
        %247 = vmatprep.subr.mxu0 0.0
        %248 = vmatpush1.msra.mxu0 0.0
        %249 = vmatprep.subr.mxu0 0.0
        %250 = vmatpush1.msra.mxu0 0.0
        %251 = vmatprep.subr.mxu0 0.0
        %252 = vmatpush1.msra.mxu0 0.0
        %253 = vmatprep.subr.mxu0 0.0
        %254 = vmatpush1.msra.mxu0 %v219
        %255 = vmatprep.subr.mxu0 0.0
        %256 = vmatpush1.msra.mxu0 %v218
        %257 = vmatprep.subr.mxu0 0.0
        %258 = vmatpush2.msra.mxu0 0.0
        %259 = vmatprep.subr.mxu0 0.0
        %260 = vmatpush2.msra.mxu0 0.0
        %261 = vmatprep.subr.mxu0 0.0
        %262 = vmatpush2.msra.mxu0 0.0
        %263 = vmatprep.subr.mxu0 0.0
        %264 = vmatpush2.msra.mxu0 0.0
        %265 = vmatprep.subr.mxu0 0.0
        %266 = vmatpush2.msra.mxu0 0.0
        %267 = vmatprep.subr.mxu0 0.0
        %268 = vmatpush2.msra.mxu0 0.0
        %269 = vmatprep.subr.mxu0 0.0
        %270 = vmatpush2.msra.mxu0 0.0
        %271 = vmatprep.subr.mxu0 0.0
        %272 = vmatpush2.msra.mxu0 0.0
        %273 = vmatprep.subr.mxu0 0.0
        %274 = vmatpush2.msra.mxu0 0.0
        %275 = vmatprep.subr.mxu0 0.0
        %276 = vmatpush2.msra.mxu0 0.0
        %277 = vmatprep.subr.mxu0 0.0
        %278 = vmatpush2.msra.mxu0 0.0
        %279 = vmatprep.subr.mxu0 0.0
        %280 = vmatpush2.msra.mxu0 0.0
        %281 = vmatprep.subr.mxu0 0.0
        %282 = vmatpush2.msra.mxu0 0.0
        %283 = vmatprep.subr.mxu0 0.0
        %284 = vmatpush2.msra.mxu0 0.0
        %285 = vmatprep.subr.mxu0 0.0
        %286 = vmatpush2.msra.mxu0 0.0
        %287 = vmatprep.subr.mxu0 0.0
        %288 = vmatpush2.msra.mxu0 0.0
        %289 = vmatprep.mubr.f32.mxu0 0.0
        %290 = vmatmul.mubr.f32.gmra.mxu0 %v223
        %v291 = vpop.f32.mrf.mxu0
        %v292 = vadd.f32 0.0, %v291
        %v293 = vpop.f32.mrf.mxu0
        %294 = vdwg.mxu0
        %v295 = vld [vmem:[#allocation7] sm:$0xff]
        %v296 = vld [vmem:[#allocation7 + $0x8] sm:$0xff]
        %s297 = scalar_lea.vmem [#allocation5], 4
        %v298 = vld [vmem:[%s297] sm:$0xf]
        %v300 = vsel %vm221, %v298, 0
        %302 = vmatprep.subr.mxu0 0.0
        %303 = vmatpush1.msra.mxu0 0.0
        %304 = vmatprep.subr.mxu0 0.0
        %305 = vmatpush1.msra.mxu0 0.0
        %306 = vmatprep.subr.mxu0 0.0
        %307 = vmatpush1.msra.mxu0 0.0
        %308 = vmatprep.subr.mxu0 0.0
        %309 = vmatpush1.msra.mxu0 0.0
        %310 = vmatprep.subr.mxu0 0.0
        %311 = vmatpush1.msra.mxu0 0.0
        %312 = vmatprep.subr.mxu0 0.0
        %313 = vmatpush1.msra.mxu0 0.0
        %314 = vmatprep.subr.mxu0 0.0
        %315 = vmatpush1.msra.mxu0 0.0
        %316 = vmatprep.subr.mxu0 0.0
        %317 = vmatpush1.msra.mxu0 0.0
        %318 = vmatprep.subr.mxu0 0.0
        %319 = vmatpush1.msra.mxu0 0.0
        %320 = vmatprep.subr.mxu0 0.0
        %321 = vmatpush1.msra.mxu0 0.0
        %322 = vmatprep.subr.mxu0 0.0
        %323 = vmatpush1.msra.mxu0 0.0
        %324 = vmatprep.subr.mxu0 0.0
        %325 = vmatpush1.msra.mxu0 0.0
        %326 = vmatprep.subr.mxu0 0.0
        %327 = vmatpush1.msra.mxu0 0.0
        %328 = vmatprep.subr.mxu0 0.0
        %329 = vmatpush1.msra.mxu0 0.0
        %330 = vmatprep.subr.mxu0 0.0
        %331 = vmatpush1.msra.mxu0 %v219
        %332 = vmatprep.subr.mxu0 0.0
        %333 = vmatpush1.msra.mxu0 %v218
        %334 = vmatprep.subr.mxu0 0.0
        %335 = vmatpush2.msra.mxu0 0.0
        %336 = vmatprep.subr.mxu0 0.0
        %337 = vmatpush2.msra.mxu0 0.0
        %338 = vmatprep.subr.mxu0 0.0
        %339 = vmatpush2.msra.mxu0 0.0
        %340 = vmatprep.subr.mxu0 0.0
        %341 = vmatpush2.msra.mxu0 0.0
        %342 = vmatprep.subr.mxu0 0.0
        %343 = vmatpush2.msra.mxu0 0.0
        %344 = vmatprep.subr.mxu0 0.0
        %345 = vmatpush2.msra.mxu0 0.0
        %346 = vmatprep.subr.mxu0 0.0
        %347 = vmatpush2.msra.mxu0 0.0
        %348 = vmatprep.subr.mxu0 0.0
        %349 = vmatpush2.msra.mxu0 0.0
        %350 = vmatprep.subr.mxu0 0.0
        %351 = vmatpush2.msra.mxu0 0.0
        %352 = vmatprep.subr.mxu0 0.0
        %353 = vmatpush2.msra.mxu0 0.0
        %354 = vmatprep.subr.mxu0 0.0
        %355 = vmatpush2.msra.mxu0 0.0
        %356 = vmatprep.subr.mxu0 0.0
        %357 = vmatpush2.msra.mxu0 0.0
        %358 = vmatprep.subr.mxu0 0.0
        %359 = vmatpush2.msra.mxu0 0.0
        %360 = vmatprep.subr.mxu0 0.0
        %361 = vmatpush2.msra.mxu0 0.0
        %362 = vmatprep.subr.mxu0 0.0
        %363 = vmatpush2.msra.mxu0 0.0
        %364 = vmatprep.subr.mxu0 0.0
        %365 = vmatpush2.msra.mxu0 0.0
        %366 = vmatprep.mubr.f32.mxu0 0.0
        %367 = vmatmul.mubr.f32.gmra.mxu0 %v300
        %v368 = vpop.f32.mrf.mxu0
        %v369 = vadd.f32 0.0, %v368
        %v370 = vpop.f32.mrf.mxu0
        %371 = vdwg.mxu0
        %s372 = scalar_lea.vmem [#allocation7], 16
        %v373 = vld [vmem:[%s372] sm:$0xff]
        %v374 = vld [vmem:[%s372 + $0x8] sm:$0xff]
        %v376 = vsel %vm221, %v369, 0
        %378 = vmatprep.subr.mxu0 0.0
        %379 = vmatpush1.msra.mxu0 0.0
        %380 = vmatprep.subr.mxu0 0.0
        %381 = vmatpush1.msra.mxu0 0.0
        %382 = vmatprep.subr.mxu0 0.0
        %383 = vmatpush1.msra.mxu0 0.0
        %384 = vmatprep.subr.mxu0 0.0
        %385 = vmatpush1.msra.mxu0 0.0
        %386 = vmatprep.subr.mxu0 0.0
        %387 = vmatpush1.msra.mxu0 0.0
        %388 = vmatprep.subr.mxu0 0.0
        %389 = vmatpush1.msra.mxu0 0.0
        %390 = vmatprep.subr.mxu0 0.0
        %391 = vmatpush1.msra.mxu0 0.0
        %392 = vmatprep.subr.mxu0 0.0
        %393 = vmatpush1.msra.mxu0 0.0
        %394 = vmatprep.subr.mxu0 0.0
        %395 = vmatpush1.msra.mxu0 0.0
        %396 = vmatprep.subr.mxu0 0.0
        %397 = vmatpush1.msra.mxu0 0.0
        %398 = vmatprep.subr.mxu0 0.0
        %399 = vmatpush1.msra.mxu0 0.0
        %400 = vmatprep.subr.mxu0 0.0
        %401 = vmatpush1.msra.mxu0 0.0
        %402 = vmatprep.subr.mxu0 0.0
        %403 = vmatpush1.msra.mxu0 0.0
        %404 = vmatprep.subr.mxu0 0.0
        %405 = vmatpush1.msra.mxu0 0.0
        %406 = vmatprep.subr.mxu0 0.0
        %407 = vmatpush1.msra.mxu0 %v374
        %408 = vmatprep.subr.mxu0 0.0
        %409 = vmatpush1.msra.mxu0 %v373
        %410 = vmatprep.subr.mxu0 0.0
        %411 = vmatpush2.msra.mxu0 0.0
        %412 = vmatprep.subr.mxu0 0.0
        %413 = vmatpush2.msra.mxu0 0.0
        %414 = vmatprep.subr.mxu0 0.0
        %415 = vmatpush2.msra.mxu0 0.0
        %416 = vmatprep.subr.mxu0 0.0
        %417 = vmatpush2.msra.mxu0 0.0
        %418 = vmatprep.subr.mxu0 0.0
        %419 = vmatpush2.msra.mxu0 0.0
        %420 = vmatprep.subr.mxu0 0.0
        %421 = vmatpush2.msra.mxu0 0.0
        %422 = vmatprep.subr.mxu0 0.0
        %423 = vmatpush2.msra.mxu0 0.0
        %424 = vmatprep.subr.mxu0 0.0
        %425 = vmatpush2.msra.mxu0 0.0
        %426 = vmatprep.subr.mxu0 0.0
        %427 = vmatpush2.msra.mxu0 0.0
        %428 = vmatprep.subr.mxu0 0.0
        %429 = vmatpush2.msra.mxu0 0.0
        %430 = vmatprep.subr.mxu0 0.0
        %431 = vmatpush2.msra.mxu0 0.0
        %432 = vmatprep.subr.mxu0 0.0
        %433 = vmatpush2.msra.mxu0 0.0
        %434 = vmatprep.subr.mxu0 0.0
        %435 = vmatpush2.msra.mxu0 0.0
        %436 = vmatprep.subr.mxu0 0.0
        %437 = vmatpush2.msra.mxu0 0.0
        %438 = vmatprep.subr.mxu0 0.0
        %439 = vmatpush2.msra.mxu0 0.0
        %440 = vmatprep.subr.mxu0 0.0
        %441 = vmatpush2.msra.mxu0 0.0
        %442 = vmatprep.mubr.f32.mxu0 0.0
        %443 = vmatmul.mubr.f32.gmra.mxu0 %v376
        %v444 = vpop.f32.mrf.mxu0
        %v445 = vadd.f32 0.0, %v444
        %v446 = vpop.f32.mrf.mxu0
        %447 = vdwg.mxu0
        %v449 = vsel %vm221, %v292, 0
        %451 = vmatprep.subr.mxu0 0.0
        %452 = vmatpush1.msra.mxu0 0.0
        %453 = vmatprep.subr.mxu0 0.0
        %454 = vmatpush1.msra.mxu0 0.0
        %455 = vmatprep.subr.mxu0 0.0
        %456 = vmatpush1.msra.mxu0 0.0
        %457 = vmatprep.subr.mxu0 0.0
        %458 = vmatpush1.msra.mxu0 0.0
        %459 = vmatprep.subr.mxu0 0.0
        %460 = vmatpush1.msra.mxu0 0.0
        %461 = vmatprep.subr.mxu0 0.0
        %462 = vmatpush1.msra.mxu0 0.0
        %463 = vmatprep.subr.mxu0 0.0
        %464 = vmatpush1.msra.mxu0 0.0
        %465 = vmatprep.subr.mxu0 0.0
        %466 = vmatpush1.msra.mxu0 0.0
        %467 = vmatprep.subr.mxu0 0.0
        %468 = vmatpush1.msra.mxu0 0.0
        %469 = vmatprep.subr.mxu0 0.0
        %470 = vmatpush1.msra.mxu0 0.0
        %471 = vmatprep.subr.mxu0 0.0
        %472 = vmatpush1.msra.mxu0 0.0
        %473 = vmatprep.subr.mxu0 0.0
        %474 = vmatpush1.msra.mxu0 0.0
        %475 = vmatprep.subr.mxu0 0.0
        %476 = vmatpush1.msra.mxu0 0.0
        %477 = vmatprep.subr.mxu0 0.0
        %478 = vmatpush1.msra.mxu0 0.0
        %479 = vmatprep.subr.mxu0 0.0
        %480 = vmatpush1.msra.mxu0 %v296
        %481 = vmatprep.subr.mxu0 0.0
        %482 = vmatpush1.msra.mxu0 %v295
        %483 = vmatprep.subr.mxu0 0.0
        %484 = vmatpush2.msra.mxu0 0.0
        %485 = vmatprep.subr.mxu0 0.0
        %486 = vmatpush2.msra.mxu0 0.0
        %487 = vmatprep.subr.mxu0 0.0
        %488 = vmatpush2.msra.mxu0 0.0
        %489 = vmatprep.subr.mxu0 0.0
        %490 = vmatpush2.msra.mxu0 0.0
        %491 = vmatprep.subr.mxu0 0.0
        %492 = vmatpush2.msra.mxu0 0.0
        %493 = vmatprep.subr.mxu0 0.0
        %494 = vmatpush2.msra.mxu0 0.0
        %495 = vmatprep.subr.mxu0 0.0
        %496 = vmatpush2.msra.mxu0 0.0
        %497 = vmatprep.subr.mxu0 0.0
        %498 = vmatpush2.msra.mxu0 0.0
        %499 = vmatprep.subr.mxu0 0.0
        %500 = vmatpush2.msra.mxu0 0.0
        %501 = vmatprep.subr.mxu0 0.0
        %502 = vmatpush2.msra.mxu0 0.0
        %503 = vmatprep.subr.mxu0 0.0
        %504 = vmatpush2.msra.mxu0 0.0
        %505 = vmatprep.subr.mxu0 0.0
        %506 = vmatpush2.msra.mxu0 0.0
        %507 = vmatprep.subr.mxu0 0.0
        %508 = vmatpush2.msra.mxu0 0.0
        %509 = vmatprep.subr.mxu0 0.0
        %510 = vmatpush2.msra.mxu0 0.0
        %511 = vmatprep.subr.mxu0 0.0
        %512 = vmatpush2.msra.mxu0 0.0
        %513 = vmatprep.subr.mxu0 0.0
        %514 = vmatpush2.msra.mxu0 0.0
        %515 = vmatprep.mubr.f32.mxu0 0.0
        %516 = vmatmul.mubr.f32.gmra.mxu0 %v449
        %v517 = vpop.f32.mrf.mxu0
        %v518 = vadd.f32 %v445, %v517
        %v519 = vpop.f32.mrf.mxu0
        %520 = vdwg.mxu0
        %s521 = scalar_lea.vmem [#allocation5], 8
        %v522 = vld [vmem:[%s521] sm:$0xf]
        %v524 = vsel %vm221, %v522, 0
        %526 = vmatprep.subr.mxu0 0.0
        %527 = vmatpush1.msra.mxu0 0.0
        %528 = vmatprep.subr.mxu0 0.0
        %529 = vmatpush1.msra.mxu0 0.0
        %530 = vmatprep.subr.mxu0 0.0
        %531 = vmatpush1.msra.mxu0 0.0
        %532 = vmatprep.subr.mxu0 0.0
        %533 = vmatpush1.msra.mxu0 0.0
        %534 = vmatprep.subr.mxu0 0.0
        %535 = vmatpush1.msra.mxu0 0.0
        %536 = vmatprep.subr.mxu0 0.0
        %537 = vmatpush1.msra.mxu0 0.0
        %538 = vmatprep.subr.mxu0 0.0
        %539 = vmatpush1.msra.mxu0 0.0
        %540 = vmatprep.subr.mxu0 0.0
        %541 = vmatpush1.msra.mxu0 0.0
        %542 = vmatprep.subr.mxu0 0.0
        %543 = vmatpush1.msra.mxu0 0.0
        %544 = vmatprep.subr.mxu0 0.0
        %545 = vmatpush1.msra.mxu0 0.0
        %546 = vmatprep.subr.mxu0 0.0
        %547 = vmatpush1.msra.mxu0 0.0
        %548 = vmatprep.subr.mxu0 0.0
        %549 = vmatpush1.msra.mxu0 0.0
        %550 = vmatprep.subr.mxu0 0.0
        %551 = vmatpush1.msra.mxu0 0.0
        %552 = vmatprep.subr.mxu0 0.0
        %553 = vmatpush1.msra.mxu0 0.0
        %554 = vmatprep.subr.mxu0 0.0
        %555 = vmatpush1.msra.mxu0 %v219
        %556 = vmatprep.subr.mxu0 0.0
        %557 = vmatpush1.msra.mxu0 %v218
        %558 = vmatprep.subr.mxu0 0.0
        %559 = vmatpush2.msra.mxu0 0.0
        %560 = vmatprep.subr.mxu0 0.0
        %561 = vmatpush2.msra.mxu0 0.0
        %562 = vmatprep.subr.mxu0 0.0
        %563 = vmatpush2.msra.mxu0 0.0
        %564 = vmatprep.subr.mxu0 0.0
        %565 = vmatpush2.msra.mxu0 0.0
        %566 = vmatprep.subr.mxu0 0.0
        %567 = vmatpush2.msra.mxu0 0.0
        %568 = vmatprep.subr.mxu0 0.0
        %569 = vmatpush2.msra.mxu0 0.0
        %570 = vmatprep.subr.mxu0 0.0
        %571 = vmatpush2.msra.mxu0 0.0
        %572 = vmatprep.subr.mxu0 0.0
        %573 = vmatpush2.msra.mxu0 0.0
        %574 = vmatprep.subr.mxu0 0.0
        %575 = vmatpush2.msra.mxu0 0.0
        %576 = vmatprep.subr.mxu0 0.0
        %577 = vmatpush2.msra.mxu0 0.0
        %578 = vmatprep.subr.mxu0 0.0
        %579 = vmatpush2.msra.mxu0 0.0
        %580 = vmatprep.subr.mxu0 0.0
        %581 = vmatpush2.msra.mxu0 0.0
        %582 = vmatprep.subr.mxu0 0.0
        %583 = vmatpush2.msra.mxu0 0.0
        %584 = vmatprep.subr.mxu0 0.0
        %585 = vmatpush2.msra.mxu0 0.0
        %586 = vmatprep.subr.mxu0 0.0
        %587 = vmatpush2.msra.mxu0 0.0
        %588 = vmatprep.subr.mxu0 0.0
        %589 = vmatpush2.msra.mxu0 0.0
        %590 = vmatprep.mubr.f32.mxu0 0.0
        %591 = vmatmul.mubr.f32.gmra.mxu0 %v524
        %v592 = vpop.f32.mrf.mxu0
        %v593 = vadd.f32 0.0, %v592
        %v594 = vpop.f32.mrf.mxu0
        %595 = vdwg.mxu0
        %s596 = scalar_lea.vmem [#allocation7], 32
        %v597 = vld [vmem:[%s596] sm:$0xff]
        %v598 = vld [vmem:[%s596 + $0x8] sm:$0xff]
        %v600 = vsel %vm221, %v593, 0
        %602 = vmatprep.subr.mxu0 0.0
        %603 = vmatpush1.msra.mxu0 0.0
        %604 = vmatprep.subr.mxu0 0.0
        %605 = vmatpush1.msra.mxu0 0.0
        %606 = vmatprep.subr.mxu0 0.0
        %607 = vmatpush1.msra.mxu0 0.0
        %608 = vmatprep.subr.mxu0 0.0
        %609 = vmatpush1.msra.mxu0 0.0
        %610 = vmatprep.subr.mxu0 0.0
        %611 = vmatpush1.msra.mxu0 0.0
        %612 = vmatprep.subr.mxu0 0.0
        %613 = vmatpush1.msra.mxu0 0.0
        %614 = vmatprep.subr.mxu0 0.0
        %615 = vmatpush1.msra.mxu0 0.0
        %616 = vmatprep.subr.mxu0 0.0
        %617 = vmatpush1.msra.mxu0 0.0
        %618 = vmatprep.subr.mxu0 0.0
        %619 = vmatpush1.msra.mxu0 0.0
        %620 = vmatprep.subr.mxu0 0.0
        %621 = vmatpush1.msra.mxu0 0.0
        %622 = vmatprep.subr.mxu0 0.0
        %623 = vmatpush1.msra.mxu0 0.0
        %624 = vmatprep.subr.mxu0 0.0
        %625 = vmatpush1.msra.mxu0 0.0
        %626 = vmatprep.subr.mxu0 0.0
        %627 = vmatpush1.msra.mxu0 0.0
        %628 = vmatprep.subr.mxu0 0.0
        %629 = vmatpush1.msra.mxu0 0.0
        %630 = vmatprep.subr.mxu0 0.0
        %631 = vmatpush1.msra.mxu0 %v598
        %632 = vmatprep.subr.mxu0 0.0
        %633 = vmatpush1.msra.mxu0 %v597
        %634 = vmatprep.subr.mxu0 0.0
        %635 = vmatpush2.msra.mxu0 0.0
        %636 = vmatprep.subr.mxu0 0.0
        %637 = vmatpush2.msra.mxu0 0.0
        %638 = vmatprep.subr.mxu0 0.0
        %639 = vmatpush2.msra.mxu0 0.0
        %640 = vmatprep.subr.mxu0 0.0
        %641 = vmatpush2.msra.mxu0 0.0
        %642 = vmatprep.subr.mxu0 0.0
        %643 = vmatpush2.msra.mxu0 0.0
        %644 = vmatprep.subr.mxu0 0.0
        %645 = vmatpush2.msra.mxu0 0.0
        %646 = vmatprep.subr.mxu0 0.0
        %647 = vmatpush2.msra.mxu0 0.0
        %648 = vmatprep.subr.mxu0 0.0
        %649 = vmatpush2.msra.mxu0 0.0
        %650 = vmatprep.subr.mxu0 0.0
        %651 = vmatpush2.msra.mxu0 0.0
        %652 = vmatprep.subr.mxu0 0.0
        %653 = vmatpush2.msra.mxu0 0.0
        %654 = vmatprep.subr.mxu0 0.0
        %655 = vmatpush2.msra.mxu0 0.0
        %656 = vmatprep.subr.mxu0 0.0
        %657 = vmatpush2.msra.mxu0 0.0
        %658 = vmatprep.subr.mxu0 0.0
        %659 = vmatpush2.msra.mxu0 0.0
        %660 = vmatprep.subr.mxu0 0.0
        %661 = vmatpush2.msra.mxu0 0.0
        %662 = vmatprep.subr.mxu0 0.0
        %663 = vmatpush2.msra.mxu0 0.0
        %664 = vmatprep.subr.mxu0 0.0
        %665 = vmatpush2.msra.mxu0 0.0
        %666 = vmatprep.mubr.f32.mxu0 0.0
        %667 = vmatmul.mubr.f32.gmra.mxu0 %v600
        %v668 = vpop.f32.mrf.mxu0
        %v669 = vadd.f32 0.0, %v668
        %v670 = vpop.f32.mrf.mxu0
        %671 = vdwg.mxu0
        %v672 = vadd.f32 %v518, %v669
        %s673 = scalar_lea.vmem [#allocation5], 12
        %v674 = vld [vmem:[%s673] sm:$0xf]
        %v676 = vsel %vm221, %v674, 0
        %678 = vmatprep.subr.mxu0 0.0
        %679 = vmatpush1.msra.mxu0 0.0
        %680 = vmatprep.subr.mxu0 0.0
        %681 = vmatpush1.msra.mxu0 0.0
        %682 = vmatprep.subr.mxu0 0.0
        %683 = vmatpush1.msra.mxu0 0.0
        %684 = vmatprep.subr.mxu0 0.0
        %685 = vmatpush1.msra.mxu0 0.0
        %686 = vmatprep.subr.mxu0 0.0
        %687 = vmatpush1.msra.mxu0 0.0
        %688 = vmatprep.subr.mxu0 0.0
        %689 = vmatpush1.msra.mxu0 0.0
        %690 = vmatprep.subr.mxu0 0.0
        %691 = vmatpush1.msra.mxu0 0.0
        %692 = vmatprep.subr.mxu0 0.0
        %693 = vmatpush1.msra.mxu0 0.0
        %694 = vmatprep.subr.mxu0 0.0
        %695 = vmatpush1.msra.mxu0 0.0
        %696 = vmatprep.subr.mxu0 0.0
        %697 = vmatpush1.msra.mxu0 0.0
        %698 = vmatprep.subr.mxu0 0.0
        %699 = vmatpush1.msra.mxu0 0.0
        %700 = vmatprep.subr.mxu0 0.0
        %701 = vmatpush1.msra.mxu0 0.0
        %702 = vmatprep.subr.mxu0 0.0
        %703 = vmatpush1.msra.mxu0 0.0
        %704 = vmatprep.subr.mxu0 0.0
        %705 = vmatpush1.msra.mxu0 0.0
        %706 = vmatprep.subr.mxu0 0.0
        %707 = vmatpush1.msra.mxu0 %v219
        %708 = vmatprep.subr.mxu0 0.0
        %709 = vmatpush1.msra.mxu0 %v218
        %710 = vmatprep.subr.mxu0 0.0
        %711 = vmatpush2.msra.mxu0 0.0
        %712 = vmatprep.subr.mxu0 0.0
        %713 = vmatpush2.msra.mxu0 0.0
        %714 = vmatprep.subr.mxu0 0.0
        %715 = vmatpush2.msra.mxu0 0.0
        %716 = vmatprep.subr.mxu0 0.0
        %717 = vmatpush2.msra.mxu0 0.0
        %718 = vmatprep.subr.mxu0 0.0
        %719 = vmatpush2.msra.mxu0 0.0
        %720 = vmatprep.subr.mxu0 0.0
        %721 = vmatpush2.msra.mxu0 0.0
        %722 = vmatprep.subr.mxu0 0.0
        %723 = vmatpush2.msra.mxu0 0.0
        %724 = vmatprep.subr.mxu0 0.0
        %725 = vmatpush2.msra.mxu0 0.0
        %726 = vmatprep.subr.mxu0 0.0
        %727 = vmatpush2.msra.mxu0 0.0
        %728 = vmatprep.subr.mxu0 0.0
        %729 = vmatpush2.msra.mxu0 0.0
        %730 = vmatprep.subr.mxu0 0.0
        %731 = vmatpush2.msra.mxu0 0.0
        %732 = vmatprep.subr.mxu0 0.0
        %733 = vmatpush2.msra.mxu0 0.0
        %734 = vmatprep.subr.mxu0 0.0
        %735 = vmatpush2.msra.mxu0 0.0
        %736 = vmatprep.subr.mxu0 0.0
        %737 = vmatpush2.msra.mxu0 0.0
        %738 = vmatprep.subr.mxu0 0.0
        %739 = vmatpush2.msra.mxu0 0.0
        %740 = vmatprep.subr.mxu0 0.0
        %741 = vmatpush2.msra.mxu0 0.0
        %742 = vmatprep.mubr.f32.mxu0 0.0
        %743 = vmatmul.mubr.f32.gmra.mxu0 %v676
        %v744 = vpop.f32.mrf.mxu0
        %v745 = vadd.f32 0.0, %v744
        %v746 = vpop.f32.mrf.mxu0
        %747 = vdwg.mxu0
        %s748 = scalar_lea.vmem [#allocation7], 48
        %v749 = vld [vmem:[%s748] sm:$0xff]
        %v750 = vld [vmem:[%s748 + $0x8] sm:$0xff]
        %v752 = vsel %vm221, %v745, 0
        %754 = vmatprep.subr.mxu0 0.0
        %755 = vmatpush1.msra.mxu0 0.0
        %756 = vmatprep.subr.mxu0 0.0
        %757 = vmatpush1.msra.mxu0 0.0
        %758 = vmatprep.subr.mxu0 0.0
        %759 = vmatpush1.msra.mxu0 0.0
        %760 = vmatprep.subr.mxu0 0.0
        %761 = vmatpush1.msra.mxu0 0.0
        %762 = vmatprep.subr.mxu0 0.0
        %763 = vmatpush1.msra.mxu0 0.0
        %764 = vmatprep.subr.mxu0 0.0
        %765 = vmatpush1.msra.mxu0 0.0
        %766 = vmatprep.subr.mxu0 0.0
        %767 = vmatpush1.msra.mxu0 0.0
        %768 = vmatprep.subr.mxu0 0.0
        %769 = vmatpush1.msra.mxu0 0.0
        %770 = vmatprep.subr.mxu0 0.0
        %771 = vmatpush1.msra.mxu0 0.0
        %772 = vmatprep.subr.mxu0 0.0
        %773 = vmatpush1.msra.mxu0 0.0
        %774 = vmatprep.subr.mxu0 0.0
        %775 = vmatpush1.msra.mxu0 0.0
        %776 = vmatprep.subr.mxu0 0.0
        %777 = vmatpush1.msra.mxu0 0.0
        %778 = vmatprep.subr.mxu0 0.0
        %779 = vmatpush1.msra.mxu0 0.0
        %780 = vmatprep.subr.mxu0 0.0
        %781 = vmatpush1.msra.mxu0 0.0
        %782 = vmatprep.subr.mxu0 0.0
        %783 = vmatpush1.msra.mxu0 %v750
        %784 = vmatprep.subr.mxu0 0.0
        %785 = vmatpush1.msra.mxu0 %v749
        %786 = vmatprep.subr.mxu0 0.0
        %787 = vmatpush2.msra.mxu0 0.0
        %788 = vmatprep.subr.mxu0 0.0
        %789 = vmatpush2.msra.mxu0 0.0
        %790 = vmatprep.subr.mxu0 0.0
        %791 = vmatpush2.msra.mxu0 0.0
        %792 = vmatprep.subr.mxu0 0.0
        %793 = vmatpush2.msra.mxu0 0.0
        %794 = vmatprep.subr.mxu0 0.0
        %795 = vmatpush2.msra.mxu0 0.0
        %796 = vmatprep.subr.mxu0 0.0
        %797 = vmatpush2.msra.mxu0 0.0
        %798 = vmatprep.subr.mxu0 0.0
        %799 = vmatpush2.msra.mxu0 0.0
        %800 = vmatprep.subr.mxu0 0.0
        %801 = vmatpush2.msra.mxu0 0.0
        %802 = vmatprep.subr.mxu0 0.0
        %803 = vmatpush2.msra.mxu0 0.0
        %804 = vmatprep.subr.mxu0 0.0
        %805 = vmatpush2.msra.mxu0 0.0
        %806 = vmatprep.subr.mxu0 0.0
        %807 = vmatpush2.msra.mxu0 0.0
        %808 = vmatprep.subr.mxu0 0.0
        %809 = vmatpush2.msra.mxu0 0.0
        %810 = vmatprep.subr.mxu0 0.0
        %811 = vmatpush2.msra.mxu0 0.0
        %812 = vmatprep.subr.mxu0 0.0
        %813 = vmatpush2.msra.mxu0 0.0
        %814 = vmatprep.subr.mxu0 0.0
        %815 = vmatpush2.msra.mxu0 0.0
        %816 = vmatprep.subr.mxu0 0.0
        %817 = vmatpush2.msra.mxu0 0.0
        %818 = vmatprep.mubr.f32.mxu0 0.0
        %819 = vmatmul.mubr.f32.gmra.mxu0 %v752
        %v820 = vpop.f32.mrf.mxu0
        %v821 = vadd.f32 0.0, %v820
        %v822 = vpop.f32.mrf.mxu0
        %823 = vdwg.mxu0
        %v824 = vadd.f32 %v672, %v821
        %s825 = scalar_lea.vmem %s187, 16 [#allocation2]
        %v826 = vld [vmem:[%s825] sm:$0xff]
        %v827 = vld [vmem:[%s825 + $0x8] sm:$0xff]
        %828 = vmatprep.subr.mxu0 0.0
        %829 = vmatpush1.msra.mxu0 0.0
        %830 = vmatprep.subr.mxu0 0.0
        %831 = vmatpush1.msra.mxu0 0.0
        %832 = vmatprep.subr.mxu0 0.0
        %833 = vmatpush1.msra.mxu0 0.0
        %834 = vmatprep.subr.mxu0 0.0
        %835 = vmatpush1.msra.mxu0 0.0
        %836 = vmatprep.subr.mxu0 0.0
        %837 = vmatpush1.msra.mxu0 0.0
        %838 = vmatprep.subr.mxu0 0.0
        %839 = vmatpush1.msra.mxu0 0.0
        %840 = vmatprep.subr.mxu0 0.0
        %841 = vmatpush1.msra.mxu0 0.0
        %842 = vmatprep.subr.mxu0 0.0
        %843 = vmatpush1.msra.mxu0 0.0
        %844 = vmatprep.subr.mxu0 0.0
        %845 = vmatpush1.msra.mxu0 0.0
        %846 = vmatprep.subr.mxu0 0.0
        %847 = vmatpush1.msra.mxu0 0.0
        %848 = vmatprep.subr.mxu0 0.0
        %849 = vmatpush1.msra.mxu0 0.0
        %850 = vmatprep.subr.mxu0 0.0
        %851 = vmatpush1.msra.mxu0 0.0
        %852 = vmatprep.subr.mxu0 0.0
        %853 = vmatpush1.msra.mxu0 0.0
        %854 = vmatprep.subr.mxu0 0.0
        %855 = vmatpush1.msra.mxu0 0.0
        %856 = vmatprep.subr.mxu0 0.0
        %857 = vmatpush1.msra.mxu0 %v827
        %858 = vmatprep.subr.mxu0 0.0
        %859 = vmatpush1.msra.mxu0 %v826
        %860 = vmatprep.subr.mxu0 0.0
        %861 = vmatpush2.msra.mxu0 0.0
        %862 = vmatprep.subr.mxu0 0.0
        %863 = vmatpush2.msra.mxu0 0.0
        %864 = vmatprep.subr.mxu0 0.0
        %865 = vmatpush2.msra.mxu0 0.0
        %866 = vmatprep.subr.mxu0 0.0
        %867 = vmatpush2.msra.mxu0 0.0
        %868 = vmatprep.subr.mxu0 0.0
        %869 = vmatpush2.msra.mxu0 0.0
        %870 = vmatprep.subr.mxu0 0.0
        %871 = vmatpush2.msra.mxu0 0.0
        %872 = vmatprep.subr.mxu0 0.0
        %873 = vmatpush2.msra.mxu0 0.0
        %874 = vmatprep.subr.mxu0 0.0
        %875 = vmatpush2.msra.mxu0 0.0
        %876 = vmatprep.subr.mxu0 0.0
        %877 = vmatpush2.msra.mxu0 0.0
        %878 = vmatprep.subr.mxu0 0.0
        %879 = vmatpush2.msra.mxu0 0.0
        %880 = vmatprep.subr.mxu0 0.0
        %881 = vmatpush2.msra.mxu0 0.0
        %882 = vmatprep.subr.mxu0 0.0
        %883 = vmatpush2.msra.mxu0 0.0
        %884 = vmatprep.subr.mxu0 0.0
        %885 = vmatpush2.msra.mxu0 0.0
        %886 = vmatprep.subr.mxu0 0.0
        %887 = vmatpush2.msra.mxu0 0.0
        %888 = vmatprep.subr.mxu0 0.0
        %889 = vmatpush2.msra.mxu0 0.0
        %890 = vmatprep.subr.mxu0 0.0
        %891 = vmatpush2.msra.mxu0 0.0
        %892 = vmatprep.mubr.f32.mxu0 0.0
        %893 = vmatmul.mubr.f32.gmra.mxu0 %v223
        %v894 = vpop.f32.mrf.mxu0
        %v895 = vadd.f32 0.0, %v894
        %v896 = vpop.f32.mrf.mxu0
        %897 = vdwg.mxu0
        %s898 = scalar_lea.vmem [#allocation7], 64
        %v899 = vld [vmem:[%s898] sm:$0xff]
        %v900 = vld [vmem:[%s898 + $0x8] sm:$0xff]
        %v902 = vsel %vm221, %v895, 0
        %904 = vmatprep.subr.mxu0 0.0
        %905 = vmatpush1.msra.mxu0 0.0
        %906 = vmatprep.subr.mxu0 0.0
        %907 = vmatpush1.msra.mxu0 0.0
        %908 = vmatprep.subr.mxu0 0.0
        %909 = vmatpush1.msra.mxu0 0.0
        %910 = vmatprep.subr.mxu0 0.0
        %911 = vmatpush1.msra.mxu0 0.0
        %912 = vmatprep.subr.mxu0 0.0
        %913 = vmatpush1.msra.mxu0 0.0
        %914 = vmatprep.subr.mxu0 0.0
        %915 = vmatpush1.msra.mxu0 0.0
        %916 = vmatprep.subr.mxu0 0.0
        %917 = vmatpush1.msra.mxu0 0.0
        %918 = vmatprep.subr.mxu0 0.0
        %919 = vmatpush1.msra.mxu0 0.0
        %920 = vmatprep.subr.mxu0 0.0
        %921 = vmatpush1.msra.mxu0 0.0
        %922 = vmatprep.subr.mxu0 0.0
        %923 = vmatpush1.msra.mxu0 0.0
        %924 = vmatprep.subr.mxu0 0.0
        %925 = vmatpush1.msra.mxu0 0.0
        %926 = vmatprep.subr.mxu0 0.0
        %927 = vmatpush1.msra.mxu0 0.0
        %928 = vmatprep.subr.mxu0 0.0
        %929 = vmatpush1.msra.mxu0 0.0
        %930 = vmatprep.subr.mxu0 0.0
        %931 = vmatpush1.msra.mxu0 0.0
        %932 = vmatprep.subr.mxu0 0.0
        %933 = vmatpush1.msra.mxu0 %v900
        %934 = vmatprep.subr.mxu0 0.0
        %935 = vmatpush1.msra.mxu0 %v899
        %936 = vmatprep.subr.mxu0 0.0
        %937 = vmatpush2.msra.mxu0 0.0
        %938 = vmatprep.subr.mxu0 0.0
        %939 = vmatpush2.msra.mxu0 0.0
        %940 = vmatprep.subr.mxu0 0.0
        %941 = vmatpush2.msra.mxu0 0.0
        %942 = vmatprep.subr.mxu0 0.0
        %943 = vmatpush2.msra.mxu0 0.0
        %944 = vmatprep.subr.mxu0 0.0
        %945 = vmatpush2.msra.mxu0 0.0
        %946 = vmatprep.subr.mxu0 0.0
        %947 = vmatpush2.msra.mxu0 0.0
        %948 = vmatprep.subr.mxu0 0.0
        %949 = vmatpush2.msra.mxu0 0.0
        %950 = vmatprep.subr.mxu0 0.0
        %951 = vmatpush2.msra.mxu0 0.0
        %952 = vmatprep.subr.mxu0 0.0
        %953 = vmatpush2.msra.mxu0 0.0
        %954 = vmatprep.subr.mxu0 0.0
        %955 = vmatpush2.msra.mxu0 0.0
        %956 = vmatprep.subr.mxu0 0.0
        %957 = vmatpush2.msra.mxu0 0.0
        %958 = vmatprep.subr.mxu0 0.0
        %959 = vmatpush2.msra.mxu0 0.0
        %960 = vmatprep.subr.mxu0 0.0
        %961 = vmatpush2.msra.mxu0 0.0
        %962 = vmatprep.subr.mxu0 0.0
        %963 = vmatpush2.msra.mxu0 0.0
        %964 = vmatprep.subr.mxu0 0.0
        %965 = vmatpush2.msra.mxu0 0.0
        %966 = vmatprep.subr.mxu0 0.0
        %967 = vmatpush2.msra.mxu0 0.0
        %968 = vmatprep.mubr.f32.mxu0 0.0
        %969 = vmatmul.mubr.f32.gmra.mxu0 %v902
        %v970 = vpop.f32.mrf.mxu0
        %v971 = vadd.f32 0.0, %v970
        %v972 = vpop.f32.mrf.mxu0
        %973 = vdwg.mxu0
        %v974 = vadd.f32 %v824, %v971
        %975 = vmatprep.subr.mxu0 0.0
        %976 = vmatpush1.msra.mxu0 0.0
        %977 = vmatprep.subr.mxu0 0.0
        %978 = vmatpush1.msra.mxu0 0.0
        %979 = vmatprep.subr.mxu0 0.0
        %980 = vmatpush1.msra.mxu0 0.0
        %981 = vmatprep.subr.mxu0 0.0
        %982 = vmatpush1.msra.mxu0 0.0
        %983 = vmatprep.subr.mxu0 0.0
        %984 = vmatpush1.msra.mxu0 0.0
        %985 = vmatprep.subr.mxu0 0.0
        %986 = vmatpush1.msra.mxu0 0.0
        %987 = vmatprep.subr.mxu0 0.0
        %988 = vmatpush1.msra.mxu0 0.0
        %989 = vmatprep.subr.mxu0 0.0
        %990 = vmatpush1.msra.mxu0 0.0
        %991 = vmatprep.subr.mxu0 0.0
        %992 = vmatpush1.msra.mxu0 0.0
        %993 = vmatprep.subr.mxu0 0.0
        %994 = vmatpush1.msra.mxu0 0.0
        %995 = vmatprep.subr.mxu0 0.0
        %996 = vmatpush1.msra.mxu0 0.0
        %997 = vmatprep.subr.mxu0 0.0
        %998 = vmatpush1.msra.mxu0 0.0
        %999 = vmatprep.subr.mxu0 0.0
        %1000 = vmatpush1.msra.mxu0 0.0
        %1001 = vmatprep.subr.mxu0 0.0
        %1002 = vmatpush1.msra.mxu0 0.0
        %1003 = vmatprep.subr.mxu0 0.0
        %1004 = vmatpush1.msra.mxu0 %v827
        %1005 = vmatprep.subr.mxu0 0.0
        %1006 = vmatpush1.msra.mxu0 %v826
        %1007 = vmatprep.subr.mxu0 0.0
        %1008 = vmatpush2.msra.mxu0 0.0
        %1009 = vmatprep.subr.mxu0 0.0
        %1010 = vmatpush2.msra.mxu0 0.0
        %1011 = vmatprep.subr.mxu0 0.0
        %1012 = vmatpush2.msra.mxu0 0.0
        %1013 = vmatprep.subr.mxu0 0.0
        %1014 = vmatpush2.msra.mxu0 0.0
        %1015 = vmatprep.subr.mxu0 0.0
        %1016 = vmatpush2.msra.mxu0 0.0
        %1017 = vmatprep.subr.mxu0 0.0
        %1018 = vmatpush2.msra.mxu0 0.0
        %1019 = vmatprep.subr.mxu0 0.0
        %1020 = vmatpush2.msra.mxu0 0.0
        %1021 = vmatprep.subr.mxu0 0.0
        %1022 = vmatpush2.msra.mxu0 0.0
        %1023 = vmatprep.subr.mxu0 0.0
        %1024 = vmatpush2.msra.mxu0 0.0
        %1025 = vmatprep.subr.mxu0 0.0
        %1026 = vmatpush2.msra.mxu0 0.0
        %1027 = vmatprep.subr.mxu0 0.0
        %1028 = vmatpush2.msra.mxu0 0.0
        %1029 = vmatprep.subr.mxu0 0.0
        %1030 = vmatpush2.msra.mxu0 0.0
        %1031 = vmatprep.subr.mxu0 0.0
        %1032 = vmatpush2.msra.mxu0 0.0
        %1033 = vmatprep.subr.mxu0 0.0
        %1034 = vmatpush2.msra.mxu0 0.0
        %1035 = vmatprep.subr.mxu0 0.0
        %1036 = vmatpush2.msra.mxu0 0.0
        %1037 = vmatprep.subr.mxu0 0.0
        %1038 = vmatpush2.msra.mxu0 0.0
        %1039 = vmatprep.mubr.f32.mxu0 0.0
        %1040 = vmatmul.mubr.f32.gmra.mxu0 %v300
        %v1041 = vpop.f32.mrf.mxu0
        %v1042 = vadd.f32 0.0, %v1041
        %v1043 = vpop.f32.mrf.mxu0
        %1044 = vdwg.mxu0
        %s1045 = scalar_lea.vmem [#allocation7], 80
        %v1046 = vld [vmem:[%s1045] sm:$0xff]
        %v1047 = vld [vmem:[%s1045 + $0x8] sm:$0xff]
        %v1049 = vsel %vm221, %v1042, 0
        %1051 = vmatprep.subr.mxu0 0.0
        %1052 = vmatpush1.msra.mxu0 0.0
        %1053 = vmatprep.subr.mxu0 0.0
        %1054 = vmatpush1.msra.mxu0 0.0
        %1055 = vmatprep.subr.mxu0 0.0
        %1056 = vmatpush1.msra.mxu0 0.0
        %1057 = vmatprep.subr.mxu0 0.0
        %1058 = vmatpush1.msra.mxu0 0.0
        %1059 = vmatprep.subr.mxu0 0.0
        %1060 = vmatpush1.msra.mxu0 0.0
        %1061 = vmatprep.subr.mxu0 0.0
        %1062 = vmatpush1.msra.mxu0 0.0
        %1063 = vmatprep.subr.mxu0 0.0
        %1064 = vmatpush1.msra.mxu0 0.0
        %1065 = vmatprep.subr.mxu0 0.0
        %1066 = vmatpush1.msra.mxu0 0.0
        %1067 = vmatprep.subr.mxu0 0.0
        %1068 = vmatpush1.msra.mxu0 0.0
        %1069 = vmatprep.subr.mxu0 0.0
        %1070 = vmatpush1.msra.mxu0 0.0
        %1071 = vmatprep.subr.mxu0 0.0
        %1072 = vmatpush1.msra.mxu0 0.0
        %1073 = vmatprep.subr.mxu0 0.0
        %1074 = vmatpush1.msra.mxu0 0.0
        %1075 = vmatprep.subr.mxu0 0.0
        %1076 = vmatpush1.msra.mxu0 0.0
        %1077 = vmatprep.subr.mxu0 0.0
        %1078 = vmatpush1.msra.mxu0 0.0
        %1079 = vmatprep.subr.mxu0 0.0
        %1080 = vmatpush1.msra.mxu0 %v1047
        %1081 = vmatprep.subr.mxu0 0.0
        %1082 = vmatpush1.msra.mxu0 %v1046
        %1083 = vmatprep.subr.mxu0 0.0
        %1084 = vmatpush2.msra.mxu0 0.0
        %1085 = vmatprep.subr.mxu0 0.0
        %1086 = vmatpush2.msra.mxu0 0.0
        %1087 = vmatprep.subr.mxu0 0.0
        %1088 = vmatpush2.msra.mxu0 0.0
        %1089 = vmatprep.subr.mxu0 0.0
        %1090 = vmatpush2.msra.mxu0 0.0
        %1091 = vmatprep.subr.mxu0 0.0
        %1092 = vmatpush2.msra.mxu0 0.0
        %1093 = vmatprep.subr.mxu0 0.0
        %1094 = vmatpush2.msra.mxu0 0.0
        %1095 = vmatprep.subr.mxu0 0.0
        %1096 = vmatpush2.msra.mxu0 0.0
        %1097 = vmatprep.subr.mxu0 0.0
        %1098 = vmatpush2.msra.mxu0 0.0
        %1099 = vmatprep.subr.mxu0 0.0
        %1100 = vmatpush2.msra.mxu0 0.0
        %1101 = vmatprep.subr.mxu0 0.0
        %1102 = vmatpush2.msra.mxu0 0.0
        %1103 = vmatprep.subr.mxu0 0.0
        %1104 = vmatpush2.msra.mxu0 0.0
        %1105 = vmatprep.subr.mxu0 0.0
        %1106 = vmatpush2.msra.mxu0 0.0
        %1107 = vmatprep.subr.mxu0 0.0
        %1108 = vmatpush2.msra.mxu0 0.0
        %1109 = vmatprep.subr.mxu0 0.0
        %1110 = vmatpush2.msra.mxu0 0.0
        %1111 = vmatprep.subr.mxu0 0.0
        %1112 = vmatpush2.msra.mxu0 0.0
        %1113 = vmatprep.subr.mxu0 0.0
        %1114 = vmatpush2.msra.mxu0 0.0
        %1115 = vmatprep.mubr.f32.mxu0 0.0
        %1116 = vmatmul.mubr.f32.gmra.mxu0 %v1049
        %v1117 = vpop.f32.mrf.mxu0
        %v1118 = vadd.f32 0.0, %v1117
        %v1119 = vpop.f32.mrf.mxu0
        %1120 = vdwg.mxu0
        %v1121 = vadd.f32 %v974, %v1118
        %1122 = vmatprep.subr.mxu0 0.0
        %1123 = vmatpush1.msra.mxu0 0.0
        %1124 = vmatprep.subr.mxu0 0.0
        %1125 = vmatpush1.msra.mxu0 0.0
        %1126 = vmatprep.subr.mxu0 0.0
        %1127 = vmatpush1.msra.mxu0 0.0
        %1128 = vmatprep.subr.mxu0 0.0
        %1129 = vmatpush1.msra.mxu0 0.0
        %1130 = vmatprep.subr.mxu0 0.0
        %1131 = vmatpush1.msra.mxu0 0.0
        %1132 = vmatprep.subr.mxu0 0.0
        %1133 = vmatpush1.msra.mxu0 0.0
        %1134 = vmatprep.subr.mxu0 0.0
        %1135 = vmatpush1.msra.mxu0 0.0
        %1136 = vmatprep.subr.mxu0 0.0
        %1137 = vmatpush1.msra.mxu0 0.0
        %1138 = vmatprep.subr.mxu0 0.0
        %1139 = vmatpush1.msra.mxu0 0.0
        %1140 = vmatprep.subr.mxu0 0.0
        %1141 = vmatpush1.msra.mxu0 0.0
        %1142 = vmatprep.subr.mxu0 0.0
        %1143 = vmatpush1.msra.mxu0 0.0
        %1144 = vmatprep.subr.mxu0 0.0
        %1145 = vmatpush1.msra.mxu0 0.0
        %1146 = vmatprep.subr.mxu0 0.0
        %1147 = vmatpush1.msra.mxu0 0.0
        %1148 = vmatprep.subr.mxu0 0.0
        %1149 = vmatpush1.msra.mxu0 0.0
        %1150 = vmatprep.subr.mxu0 0.0
        %1151 = vmatpush1.msra.mxu0 %v827
        %1152 = vmatprep.subr.mxu0 0.0
        %1153 = vmatpush1.msra.mxu0 %v826
        %1154 = vmatprep.subr.mxu0 0.0
        %1155 = vmatpush2.msra.mxu0 0.0
        %1156 = vmatprep.subr.mxu0 0.0
        %1157 = vmatpush2.msra.mxu0 0.0
        %1158 = vmatprep.subr.mxu0 0.0
        %1159 = vmatpush2.msra.mxu0 0.0
        %1160 = vmatprep.subr.mxu0 0.0
        %1161 = vmatpush2.msra.mxu0 0.0
        %1162 = vmatprep.subr.mxu0 0.0
        %1163 = vmatpush2.msra.mxu0 0.0
        %1164 = vmatprep.subr.mxu0 0.0
        %1165 = vmatpush2.msra.mxu0 0.0
        %1166 = vmatprep.subr.mxu0 0.0
        %1167 = vmatpush2.msra.mxu0 0.0
        %1168 = vmatprep.subr.mxu0 0.0
        %1169 = vmatpush2.msra.mxu0 0.0
        %1170 = vmatprep.subr.mxu0 0.0
        %1171 = vmatpush2.msra.mxu0 0.0
        %1172 = vmatprep.subr.mxu0 0.0
        %1173 = vmatpush2.msra.mxu0 0.0
        %1174 = vmatprep.subr.mxu0 0.0
        %1175 = vmatpush2.msra.mxu0 0.0
        %1176 = vmatprep.subr.mxu0 0.0
        %1177 = vmatpush2.msra.mxu0 0.0
        %1178 = vmatprep.subr.mxu0 0.0
        %1179 = vmatpush2.msra.mxu0 0.0
        %1180 = vmatprep.subr.mxu0 0.0
        %1181 = vmatpush2.msra.mxu0 0.0
        %1182 = vmatprep.subr.mxu0 0.0
        %1183 = vmatpush2.msra.mxu0 0.0
        %1184 = vmatprep.subr.mxu0 0.0
        %1185 = vmatpush2.msra.mxu0 0.0
        %1186 = vmatprep.mubr.f32.mxu0 0.0
        %1187 = vmatmul.mubr.f32.gmra.mxu0 %v524
        %v1188 = vpop.f32.mrf.mxu0
        %v1189 = vadd.f32 0.0, %v1188
        %v1190 = vpop.f32.mrf.mxu0
        %1191 = vdwg.mxu0
        %s1192 = scalar_lea.vmem [#allocation7], 96
        %v1193 = vld [vmem:[%s1192] sm:$0xff]
        %v1194 = vld [vmem:[%s1192 + $0x8] sm:$0xff]
        %v1196 = vsel %vm221, %v1189, 0
        %1198 = vmatprep.subr.mxu0 0.0
        %1199 = vmatpush1.msra.mxu0 0.0
        %1200 = vmatprep.subr.mxu0 0.0
        %1201 = vmatpush1.msra.mxu0 0.0
        %1202 = vmatprep.subr.mxu0 0.0
        %1203 = vmatpush1.msra.mxu0 0.0
        %1204 = vmatprep.subr.mxu0 0.0
        %1205 = vmatpush1.msra.mxu0 0.0
        %1206 = vmatprep.subr.mxu0 0.0
        %1207 = vmatpush1.msra.mxu0 0.0
        %1208 = vmatprep.subr.mxu0 0.0
        %1209 = vmatpush1.msra.mxu0 0.0
        %1210 = vmatprep.subr.mxu0 0.0
        %1211 = vmatpush1.msra.mxu0 0.0
        %1212 = vmatprep.subr.mxu0 0.0
        %1213 = vmatpush1.msra.mxu0 0.0
        %1214 = vmatprep.subr.mxu0 0.0
        %1215 = vmatpush1.msra.mxu0 0.0
        %1216 = vmatprep.subr.mxu0 0.0
        %1217 = vmatpush1.msra.mxu0 0.0
        %1218 = vmatprep.subr.mxu0 0.0
        %1219 = vmatpush1.msra.mxu0 0.0
        %1220 = vmatprep.subr.mxu0 0.0
        %1221 = vmatpush1.msra.mxu0 0.0
        %1222 = vmatprep.subr.mxu0 0.0
        %1223 = vmatpush1.msra.mxu0 0.0
        %1224 = vmatprep.subr.mxu0 0.0
        %1225 = vmatpush1.msra.mxu0 0.0
        %1226 = vmatprep.subr.mxu0 0.0
        %1227 = vmatpush1.msra.mxu0 %v1194
        %1228 = vmatprep.subr.mxu0 0.0
        %1229 = vmatpush1.msra.mxu0 %v1193
        %1230 = vmatprep.subr.mxu0 0.0
        %1231 = vmatpush2.msra.mxu0 0.0
        %1232 = vmatprep.subr.mxu0 0.0
        %1233 = vmatpush2.msra.mxu0 0.0
        %1234 = vmatprep.subr.mxu0 0.0
        %1235 = vmatpush2.msra.mxu0 0.0
        %1236 = vmatprep.subr.mxu0 0.0
        %1237 = vmatpush2.msra.mxu0 0.0
        %1238 = vmatprep.subr.mxu0 0.0
        %1239 = vmatpush2.msra.mxu0 0.0
        %1240 = vmatprep.subr.mxu0 0.0
        %1241 = vmatpush2.msra.mxu0 0.0
        %1242 = vmatprep.subr.mxu0 0.0
        %1243 = vmatpush2.msra.mxu0 0.0
        %1244 = vmatprep.subr.mxu0 0.0
        %1245 = vmatpush2.msra.mxu0 0.0
        %1246 = vmatprep.subr.mxu0 0.0
        %1247 = vmatpush2.msra.mxu0 0.0
        %1248 = vmatprep.subr.mxu0 0.0
        %1249 = vmatpush2.msra.mxu0 0.0
        %1250 = vmatprep.subr.mxu0 0.0
        %1251 = vmatpush2.msra.mxu0 0.0
        %1252 = vmatprep.subr.mxu0 0.0
        %1253 = vmatpush2.msra.mxu0 0.0
        %1254 = vmatprep.subr.mxu0 0.0
        %1255 = vmatpush2.msra.mxu0 0.0
        %1256 = vmatprep.subr.mxu0 0.0
        %1257 = vmatpush2.msra.mxu0 0.0
        %1258 = vmatprep.subr.mxu0 0.0
        %1259 = vmatpush2.msra.mxu0 0.0
        %1260 = vmatprep.subr.mxu0 0.0
        %1261 = vmatpush2.msra.mxu0 0.0
        %1262 = vmatprep.mubr.f32.mxu0 0.0
        %1263 = vmatmul.mubr.f32.gmra.mxu0 %v1196
        %v1264 = vpop.f32.mrf.mxu0
        %v1265 = vadd.f32 0.0, %v1264
        %v1266 = vpop.f32.mrf.mxu0
        %1267 = vdwg.mxu0
        %v1268 = vadd.f32 %v1121, %v1265
        %1269 = vmatprep.subr.mxu0 0.0
        %1270 = vmatpush1.msra.mxu0 0.0
        %1271 = vmatprep.subr.mxu0 0.0
        %1272 = vmatpush1.msra.mxu0 0.0
        %1273 = vmatprep.subr.mxu0 0.0
        %1274 = vmatpush1.msra.mxu0 0.0
        %1275 = vmatprep.subr.mxu0 0.0
        %1276 = vmatpush1.msra.mxu0 0.0
        %1277 = vmatprep.subr.mxu0 0.0
        %1278 = vmatpush1.msra.mxu0 0.0
        %1279 = vmatprep.subr.mxu0 0.0
        %1280 = vmatpush1.msra.mxu0 0.0
        %1281 = vmatprep.subr.mxu0 0.0
        %1282 = vmatpush1.msra.mxu0 0.0
        %1283 = vmatprep.subr.mxu0 0.0
        %1284 = vmatpush1.msra.mxu0 0.0
        %1285 = vmatprep.subr.mxu0 0.0
        %1286 = vmatpush1.msra.mxu0 0.0
        %1287 = vmatprep.subr.mxu0 0.0
        %1288 = vmatpush1.msra.mxu0 0.0
        %1289 = vmatprep.subr.mxu0 0.0
        %1290 = vmatpush1.msra.mxu0 0.0
        %1291 = vmatprep.subr.mxu0 0.0
        %1292 = vmatpush1.msra.mxu0 0.0
        %1293 = vmatprep.subr.mxu0 0.0
        %1294 = vmatpush1.msra.mxu0 0.0
        %1295 = vmatprep.subr.mxu0 0.0
        %1296 = vmatpush1.msra.mxu0 0.0
        %1297 = vmatprep.subr.mxu0 0.0
        %1298 = vmatpush1.msra.mxu0 %v827
        %1299 = vmatprep.subr.mxu0 0.0
        %1300 = vmatpush1.msra.mxu0 %v826
        %1301 = vmatprep.subr.mxu0 0.0
        %1302 = vmatpush2.msra.mxu0 0.0
        %1303 = vmatprep.subr.mxu0 0.0
        %1304 = vmatpush2.msra.mxu0 0.0
        %1305 = vmatprep.subr.mxu0 0.0
        %1306 = vmatpush2.msra.mxu0 0.0
        %1307 = vmatprep.subr.mxu0 0.0
        %1308 = vmatpush2.msra.mxu0 0.0
        %1309 = vmatprep.subr.mxu0 0.0
        %1310 = vmatpush2.msra.mxu0 0.0
        %1311 = vmatprep.subr.mxu0 0.0
        %1312 = vmatpush2.msra.mxu0 0.0
        %1313 = vmatprep.subr.mxu0 0.0
        %1314 = vmatpush2.msra.mxu0 0.0
        %1315 = vmatprep.subr.mxu0 0.0
        %1316 = vmatpush2.msra.mxu0 0.0
        %1317 = vmatprep.subr.mxu0 0.0
        %1318 = vmatpush2.msra.mxu0 0.0
        %1319 = vmatprep.subr.mxu0 0.0
        %1320 = vmatpush2.msra.mxu0 0.0
        %1321 = vmatprep.subr.mxu0 0.0
        %1322 = vmatpush2.msra.mxu0 0.0
        %1323 = vmatprep.subr.mxu0 0.0
        %1324 = vmatpush2.msra.mxu0 0.0
        %1325 = vmatprep.subr.mxu0 0.0
        %1326 = vmatpush2.msra.mxu0 0.0
        %1327 = vmatprep.subr.mxu0 0.0
        %1328 = vmatpush2.msra.mxu0 0.0
        %1329 = vmatprep.subr.mxu0 0.0
        %1330 = vmatpush2.msra.mxu0 0.0
        %1331 = vmatprep.subr.mxu0 0.0
        %1332 = vmatpush2.msra.mxu0 0.0
        %1333 = vmatprep.mubr.f32.mxu0 0.0
        %1334 = vmatmul.mubr.f32.gmra.mxu0 %v676
        %v1335 = vpop.f32.mrf.mxu0
        %v1336 = vadd.f32 0.0, %v1335
        %v1337 = vpop.f32.mrf.mxu0
        %1338 = vdwg.mxu0
        %s1339 = scalar_lea.vmem [#allocation7], 112
        %v1340 = vld [vmem:[%s1339] sm:$0xff]
        %v1341 = vld [vmem:[%s1339 + $0x8] sm:$0xff]
        %v1343 = vsel %vm221, %v1336, 0
        %1345 = vmatprep.subr.mxu0 0.0
        %1346 = vmatpush1.msra.mxu0 0.0
        %1347 = vmatprep.subr.mxu0 0.0
        %1348 = vmatpush1.msra.mxu0 0.0
        %1349 = vmatprep.subr.mxu0 0.0
        %1350 = vmatpush1.msra.mxu0 0.0
        %1351 = vmatprep.subr.mxu0 0.0
        %1352 = vmatpush1.msra.mxu0 0.0
        %1353 = vmatprep.subr.mxu0 0.0
        %1354 = vmatpush1.msra.mxu0 0.0
        %1355 = vmatprep.subr.mxu0 0.0
        %1356 = vmatpush1.msra.mxu0 0.0
        %1357 = vmatprep.subr.mxu0 0.0
        %1358 = vmatpush1.msra.mxu0 0.0
        %1359 = vmatprep.subr.mxu0 0.0
        %1360 = vmatpush1.msra.mxu0 0.0
        %1361 = vmatprep.subr.mxu0 0.0
        %1362 = vmatpush1.msra.mxu0 0.0
        %1363 = vmatprep.subr.mxu0 0.0
        %1364 = vmatpush1.msra.mxu0 0.0
        %1365 = vmatprep.subr.mxu0 0.0
        %1366 = vmatpush1.msra.mxu0 0.0
        %1367 = vmatprep.subr.mxu0 0.0
        %1368 = vmatpush1.msra.mxu0 0.0
        %1369 = vmatprep.subr.mxu0 0.0
        %1370 = vmatpush1.msra.mxu0 0.0
        %1371 = vmatprep.subr.mxu0 0.0
        %1372 = vmatpush1.msra.mxu0 0.0
        %1373 = vmatprep.subr.mxu0 0.0
        %1374 = vmatpush1.msra.mxu0 %v1341
        %1375 = vmatprep.subr.mxu0 0.0
        %1376 = vmatpush1.msra.mxu0 %v1340
        %1377 = vmatprep.subr.mxu0 0.0
        %1378 = vmatpush2.msra.mxu0 0.0
        %1379 = vmatprep.subr.mxu0 0.0
        %1380 = vmatpush2.msra.mxu0 0.0
        %1381 = vmatprep.subr.mxu0 0.0
        %1382 = vmatpush2.msra.mxu0 0.0
        %1383 = vmatprep.subr.mxu0 0.0
        %1384 = vmatpush2.msra.mxu0 0.0
        %1385 = vmatprep.subr.mxu0 0.0
        %1386 = vmatpush2.msra.mxu0 0.0
        %1387 = vmatprep.subr.mxu0 0.0
        %1388 = vmatpush2.msra.mxu0 0.0
        %1389 = vmatprep.subr.mxu0 0.0
        %1390 = vmatpush2.msra.mxu0 0.0
        %1391 = vmatprep.subr.mxu0 0.0
        %1392 = vmatpush2.msra.mxu0 0.0
        %1393 = vmatprep.subr.mxu0 0.0
        %1394 = vmatpush2.msra.mxu0 0.0
        %1395 = vmatprep.subr.mxu0 0.0
        %1396 = vmatpush2.msra.mxu0 0.0
        %1397 = vmatprep.subr.mxu0 0.0
        %1398 = vmatpush2.msra.mxu0 0.0
        %1399 = vmatprep.subr.mxu0 0.0
        %1400 = vmatpush2.msra.mxu0 0.0
        %1401 = vmatprep.subr.mxu0 0.0
        %1402 = vmatpush2.msra.mxu0 0.0
        %1403 = vmatprep.subr.mxu0 0.0
        %1404 = vmatpush2.msra.mxu0 0.0
        %1405 = vmatprep.subr.mxu0 0.0
        %1406 = vmatpush2.msra.mxu0 0.0
        %1407 = vmatprep.subr.mxu0 0.0
        %1408 = vmatpush2.msra.mxu0 0.0
        %1409 = vmatprep.mubr.f32.mxu0 0.0
        %1410 = vmatmul.mubr.f32.gmra.mxu0 %v1343
        %v1411 = vpop.f32.mrf.mxu0
        %v1412 = vadd.f32 0.0, %v1411
        %v1413 = vpop.f32.mrf.mxu0
        %1414 = vdwg.mxu0
        %v1415 = vadd.f32 %v1268, %v1412
        %s1416 = scalar_lea.vmem %s187, 32 [#allocation2]
        %v1417 = vld [vmem:[%s1416] sm:$0xff]
        %v1418 = vld [vmem:[%s1416 + $0x8] sm:$0xff]
        %1419 = vmatprep.subr.mxu0 0.0
        %1420 = vmatpush1.msra.mxu0 0.0
        %1421 = vmatprep.subr.mxu0 0.0
        %1422 = vmatpush1.msra.mxu0 0.0
        %1423 = vmatprep.subr.mxu0 0.0
        %1424 = vmatpush1.msra.mxu0 0.0
        %1425 = vmatprep.subr.mxu0 0.0
        %1426 = vmatpush1.msra.mxu0 0.0
        %1427 = vmatprep.subr.mxu0 0.0
        %1428 = vmatpush1.msra.mxu0 0.0
        %1429 = vmatprep.subr.mxu0 0.0
        %1430 = vmatpush1.msra.mxu0 0.0
        %1431 = vmatprep.subr.mxu0 0.0
        %1432 = vmatpush1.msra.mxu0 0.0
        %1433 = vmatprep.subr.mxu0 0.0
        %1434 = vmatpush1.msra.mxu0 0.0
        %1435 = vmatprep.subr.mxu0 0.0
        %1436 = vmatpush1.msra.mxu0 0.0
        %1437 = vmatprep.subr.mxu0 0.0
        %1438 = vmatpush1.msra.mxu0 0.0
        %1439 = vmatprep.subr.mxu0 0.0
        %1440 = vmatpush1.msra.mxu0 0.0
        %1441 = vmatprep.subr.mxu0 0.0
        %1442 = vmatpush1.msra.mxu0 0.0
        %1443 = vmatprep.subr.mxu0 0.0
        %1444 = vmatpush1.msra.mxu0 0.0
        %1445 = vmatprep.subr.mxu0 0.0
        %1446 = vmatpush1.msra.mxu0 0.0
        %1447 = vmatprep.subr.mxu0 0.0
        %1448 = vmatpush1.msra.mxu0 %v1418
        %1449 = vmatprep.subr.mxu0 0.0
        %1450 = vmatpush1.msra.mxu0 %v1417
        %1451 = vmatprep.subr.mxu0 0.0
        %1452 = vmatpush2.msra.mxu0 0.0
        %1453 = vmatprep.subr.mxu0 0.0
        %1454 = vmatpush2.msra.mxu0 0.0
        %1455 = vmatprep.subr.mxu0 0.0
        %1456 = vmatpush2.msra.mxu0 0.0
        %1457 = vmatprep.subr.mxu0 0.0
        %1458 = vmatpush2.msra.mxu0 0.0
        %1459 = vmatprep.subr.mxu0 0.0
        %1460 = vmatpush2.msra.mxu0 0.0
        %1461 = vmatprep.subr.mxu0 0.0
        %1462 = vmatpush2.msra.mxu0 0.0
        %1463 = vmatprep.subr.mxu0 0.0
        %1464 = vmatpush2.msra.mxu0 0.0
        %1465 = vmatprep.subr.mxu0 0.0
        %1466 = vmatpush2.msra.mxu0 0.0
        %1467 = vmatprep.subr.mxu0 0.0
        %1468 = vmatpush2.msra.mxu0 0.0
        %1469 = vmatprep.subr.mxu0 0.0
        %1470 = vmatpush2.msra.mxu0 0.0
        %1471 = vmatprep.subr.mxu0 0.0
        %1472 = vmatpush2.msra.mxu0 0.0
        %1473 = vmatprep.subr.mxu0 0.0
        %1474 = vmatpush2.msra.mxu0 0.0
        %1475 = vmatprep.subr.mxu0 0.0
        %1476 = vmatpush2.msra.mxu0 0.0
        %1477 = vmatprep.subr.mxu0 0.0
        %1478 = vmatpush2.msra.mxu0 0.0
        %1479 = vmatprep.subr.mxu0 0.0
        %1480 = vmatpush2.msra.mxu0 0.0
        %1481 = vmatprep.subr.mxu0 0.0
        %1482 = vmatpush2.msra.mxu0 0.0
        %1483 = vmatprep.mubr.f32.mxu0 0.0
        %1484 = vmatmul.mubr.f32.gmra.mxu0 %v223
        %v1485 = vpop.f32.mrf.mxu0
        %v1486 = vadd.f32 0.0, %v1485
        %v1487 = vpop.f32.mrf.mxu0
        %1488 = vdwg.mxu0
        %s1489 = scalar_lea.vmem [#allocation7], 128
        %v1490 = vld [vmem:[%s1489] sm:$0xff]
        %v1491 = vld [vmem:[%s1489 + $0x8] sm:$0xff]
        %v1493 = vsel %vm221, %v1486, 0
        %1495 = vmatprep.subr.mxu0 0.0
        %1496 = vmatpush1.msra.mxu0 0.0
        %1497 = vmatprep.subr.mxu0 0.0
        %1498 = vmatpush1.msra.mxu0 0.0
        %1499 = vmatprep.subr.mxu0 0.0
        %1500 = vmatpush1.msra.mxu0 0.0
        %1501 = vmatprep.subr.mxu0 0.0
        %1502 = vmatpush1.msra.mxu0 0.0
        %1503 = vmatprep.subr.mxu0 0.0
        %1504 = vmatpush1.msra.mxu0 0.0
        %1505 = vmatprep.subr.mxu0 0.0
        %1506 = vmatpush1.msra.mxu0 0.0
        %1507 = vmatprep.subr.mxu0 0.0
        %1508 = vmatpush1.msra.mxu0 0.0
        %1509 = vmatprep.subr.mxu0 0.0
        %1510 = vmatpush1.msra.mxu0 0.0
        %1511 = vmatprep.subr.mxu0 0.0
        %1512 = vmatpush1.msra.mxu0 0.0
        %1513 = vmatprep.subr.mxu0 0.0
        %1514 = vmatpush1.msra.mxu0 0.0
        %1515 = vmatprep.subr.mxu0 0.0
        %1516 = vmatpush1.msra.mxu0 0.0
        %1517 = vmatprep.subr.mxu0 0.0
        %1518 = vmatpush1.msra.mxu0 0.0
        %1519 = vmatprep.subr.mxu0 0.0
        %1520 = vmatpush1.msra.mxu0 0.0
        %1521 = vmatprep.subr.mxu0 0.0
        %1522 = vmatpush1.msra.mxu0 0.0
        %1523 = vmatprep.subr.mxu0 0.0
        %1524 = vmatpush1.msra.mxu0 %v1491
        %1525 = vmatprep.subr.mxu0 0.0
        %1526 = vmatpush1.msra.mxu0 %v1490
        %1527 = vmatprep.subr.mxu0 0.0
        %1528 = vmatpush2.msra.mxu0 0.0
        %1529 = vmatprep.subr.mxu0 0.0
        %1530 = vmatpush2.msra.mxu0 0.0
        %1531 = vmatprep.subr.mxu0 0.0
        %1532 = vmatpush2.msra.mxu0 0.0
        %1533 = vmatprep.subr.mxu0 0.0
        %1534 = vmatpush2.msra.mxu0 0.0
        %1535 = vmatprep.subr.mxu0 0.0
        %1536 = vmatpush2.msra.mxu0 0.0
        %1537 = vmatprep.subr.mxu0 0.0
        %1538 = vmatpush2.msra.mxu0 0.0
        %1539 = vmatprep.subr.mxu0 0.0
        %1540 = vmatpush2.msra.mxu0 0.0
        %1541 = vmatprep.subr.mxu0 0.0
        %1542 = vmatpush2.msra.mxu0 0.0
        %1543 = vmatprep.subr.mxu0 0.0
        %1544 = vmatpush2.msra.mxu0 0.0
        %1545 = vmatprep.subr.mxu0 0.0
        %1546 = vmatpush2.msra.mxu0 0.0
        %1547 = vmatprep.subr.mxu0 0.0
        %1548 = vmatpush2.msra.mxu0 0.0
        %1549 = vmatprep.subr.mxu0 0.0
        %1550 = vmatpush2.msra.mxu0 0.0
        %1551 = vmatprep.subr.mxu0 0.0
        %1552 = vmatpush2.msra.mxu0 0.0
        %1553 = vmatprep.subr.mxu0 0.0
        %1554 = vmatpush2.msra.mxu0 0.0
        %1555 = vmatprep.subr.mxu0 0.0
        %1556 = vmatpush2.msra.mxu0 0.0
        %1557 = vmatprep.subr.mxu0 0.0
        %1558 = vmatpush2.msra.mxu0 0.0
        %1559 = vmatprep.mubr.f32.mxu0 0.0
        %1560 = vmatmul.mubr.f32.gmra.mxu0 %v1493
        %v1561 = vpop.f32.mrf.mxu0
        %v1562 = vadd.f32 0.0, %v1561
        %v1563 = vpop.f32.mrf.mxu0
        %1564 = vdwg.mxu0
        %v1565 = vadd.f32 %v1415, %v1562
        %1566 = vmatprep.subr.mxu0 0.0
        %1567 = vmatpush1.msra.mxu0 0.0
        %1568 = vmatprep.subr.mxu0 0.0
        %1569 = vmatpush1.msra.mxu0 0.0
        %1570 = vmatprep.subr.mxu0 0.0
        %1571 = vmatpush1.msra.mxu0 0.0
        %1572 = vmatprep.subr.mxu0 0.0
        %1573 = vmatpush1.msra.mxu0 0.0
        %1574 = vmatprep.subr.mxu0 0.0
        %1575 = vmatpush1.msra.mxu0 0.0
        %1576 = vmatprep.subr.mxu0 0.0
        %1577 = vmatpush1.msra.mxu0 0.0
        %1578 = vmatprep.subr.mxu0 0.0
        %1579 = vmatpush1.msra.mxu0 0.0
        %1580 = vmatprep.subr.mxu0 0.0
        %1581 = vmatpush1.msra.mxu0 0.0
        %1582 = vmatprep.subr.mxu0 0.0
        %1583 = vmatpush1.msra.mxu0 0.0
        %1584 = vmatprep.subr.mxu0 0.0
        %1585 = vmatpush1.msra.mxu0 0.0
        %1586 = vmatprep.subr.mxu0 0.0
        %1587 = vmatpush1.msra.mxu0 0.0
        %1588 = vmatprep.subr.mxu0 0.0
        %1589 = vmatpush1.msra.mxu0 0.0
        %1590 = vmatprep.subr.mxu0 0.0
        %1591 = vmatpush1.msra.mxu0 0.0
        %1592 = vmatprep.subr.mxu0 0.0
        %1593 = vmatpush1.msra.mxu0 0.0
        %1594 = vmatprep.subr.mxu0 0.0
        %1595 = vmatpush1.msra.mxu0 %v1418
        %1596 = vmatprep.subr.mxu0 0.0
        %1597 = vmatpush1.msra.mxu0 %v1417
        %1598 = vmatprep.subr.mxu0 0.0
        %1599 = vmatpush2.msra.mxu0 0.0
        %1600 = vmatprep.subr.mxu0 0.0
        %1601 = vmatpush2.msra.mxu0 0.0
        %1602 = vmatprep.subr.mxu0 0.0
        %1603 = vmatpush2.msra.mxu0 0.0
        %1604 = vmatprep.subr.mxu0 0.0
        %1605 = vmatpush2.msra.mxu0 0.0
        %1606 = vmatprep.subr.mxu0 0.0
        %1607 = vmatpush2.msra.mxu0 0.0
        %1608 = vmatprep.subr.mxu0 0.0
        %1609 = vmatpush2.msra.mxu0 0.0
        %1610 = vmatprep.subr.mxu0 0.0
        %1611 = vmatpush2.msra.mxu0 0.0
        %1612 = vmatprep.subr.mxu0 0.0
        %1613 = vmatpush2.msra.mxu0 0.0
        %1614 = vmatprep.subr.mxu0 0.0
        %1615 = vmatpush2.msra.mxu0 0.0
        %1616 = vmatprep.subr.mxu0 0.0
        %1617 = vmatpush2.msra.mxu0 0.0
        %1618 = vmatprep.subr.mxu0 0.0
        %1619 = vmatpush2.msra.mxu0 0.0
        %1620 = vmatprep.subr.mxu0 0.0
        %1621 = vmatpush2.msra.mxu0 0.0
        %1622 = vmatprep.subr.mxu0 0.0
        %1623 = vmatpush2.msra.mxu0 0.0
        %1624 = vmatprep.subr.mxu0 0.0
        %1625 = vmatpush2.msra.mxu0 0.0
        %1626 = vmatprep.subr.mxu0 0.0
        %1627 = vmatpush2.msra.mxu0 0.0
        %1628 = vmatprep.subr.mxu0 0.0
        %1629 = vmatpush2.msra.mxu0 0.0
        %1630 = vmatprep.mubr.f32.mxu0 0.0
        %1631 = vmatmul.mubr.f32.gmra.mxu0 %v300
        %v1632 = vpop.f32.mrf.mxu0
        %v1633 = vadd.f32 0.0, %v1632
        %v1634 = vpop.f32.mrf.mxu0
        %1635 = vdwg.mxu0
        %s1636 = scalar_lea.vmem [#allocation7], 144
        %v1637 = vld [vmem:[%s1636] sm:$0xff]
        %v1638 = vld [vmem:[%s1636 + $0x8] sm:$0xff]
        %v1640 = vsel %vm221, %v1633, 0
        %1642 = vmatprep.subr.mxu0 0.0
        %1643 = vmatpush1.msra.mxu0 0.0
        %1644 = vmatprep.subr.mxu0 0.0
        %1645 = vmatpush1.msra.mxu0 0.0
        %1646 = vmatprep.subr.mxu0 0.0
        %1647 = vmatpush1.msra.mxu0 0.0
        %1648 = vmatprep.subr.mxu0 0.0
        %1649 = vmatpush1.msra.mxu0 0.0
        %1650 = vmatprep.subr.mxu0 0.0
        %1651 = vmatpush1.msra.mxu0 0.0
        %1652 = vmatprep.subr.mxu0 0.0
        %1653 = vmatpush1.msra.mxu0 0.0
        %1654 = vmatprep.subr.mxu0 0.0
        %1655 = vmatpush1.msra.mxu0 0.0
        %1656 = vmatprep.subr.mxu0 0.0
        %1657 = vmatpush1.msra.mxu0 0.0
        %1658 = vmatprep.subr.mxu0 0.0
        %1659 = vmatpush1.msra.mxu0 0.0
        %1660 = vmatprep.subr.mxu0 0.0
        %1661 = vmatpush1.msra.mxu0 0.0
        %1662 = vmatprep.subr.mxu0 0.0
        %1663 = vmatpush1.msra.mxu0 0.0
        %1664 = vmatprep.subr.mxu0 0.0
        %1665 = vmatpush1.msra.mxu0 0.0
        %1666 = vmatprep.subr.mxu0 0.0
        %1667 = vmatpush1.msra.mxu0 0.0
        %1668 = vmatprep.subr.mxu0 0.0
        %1669 = vmatpush1.msra.mxu0 0.0
        %1670 = vmatprep.subr.mxu0 0.0
        %1671 = vmatpush1.msra.mxu0 %v1638
        %1672 = vmatprep.subr.mxu0 0.0
        %1673 = vmatpush1.msra.mxu0 %v1637
        %1674 = vmatprep.subr.mxu0 0.0
        %1675 = vmatpush2.msra.mxu0 0.0
        %1676 = vmatprep.subr.mxu0 0.0
        %1677 = vmatpush2.msra.mxu0 0.0
        %1678 = vmatprep.subr.mxu0 0.0
        %1679 = vmatpush2.msra.mxu0 0.0
        %1680 = vmatprep.subr.mxu0 0.0
        %1681 = vmatpush2.msra.mxu0 0.0
        %1682 = vmatprep.subr.mxu0 0.0
        %1683 = vmatpush2.msra.mxu0 0.0
        %1684 = vmatprep.subr.mxu0 0.0
        %1685 = vmatpush2.msra.mxu0 0.0
        %1686 = vmatprep.subr.mxu0 0.0
        %1687 = vmatpush2.msra.mxu0 0.0
        %1688 = vmatprep.subr.mxu0 0.0
        %1689 = vmatpush2.msra.mxu0 0.0
        %1690 = vmatprep.subr.mxu0 0.0
        %1691 = vmatpush2.msra.mxu0 0.0
        %1692 = vmatprep.subr.mxu0 0.0
        %1693 = vmatpush2.msra.mxu0 0.0
        %1694 = vmatprep.subr.mxu0 0.0
        %1695 = vmatpush2.msra.mxu0 0.0
        %1696 = vmatprep.subr.mxu0 0.0
        %1697 = vmatpush2.msra.mxu0 0.0
        %1698 = vmatprep.subr.mxu0 0.0
        %1699 = vmatpush2.msra.mxu0 0.0
        %1700 = vmatprep.subr.mxu0 0.0
        %1701 = vmatpush2.msra.mxu0 0.0
        %1702 = vmatprep.subr.mxu0 0.0
        %1703 = vmatpush2.msra.mxu0 0.0
        %1704 = vmatprep.subr.mxu0 0.0
        %1705 = vmatpush2.msra.mxu0 0.0
        %1706 = vmatprep.mubr.f32.mxu0 0.0
        %1707 = vmatmul.mubr.f32.gmra.mxu0 %v1640
        %v1708 = vpop.f32.mrf.mxu0
        %v1709 = vadd.f32 0.0, %v1708
        %v1710 = vpop.f32.mrf.mxu0
        %1711 = vdwg.mxu0
        %v1712 = vadd.f32 %v1565, %v1709
        %1713 = vmatprep.subr.mxu0 0.0
        %1714 = vmatpush1.msra.mxu0 0.0
        %1715 = vmatprep.subr.mxu0 0.0
        %1716 = vmatpush1.msra.mxu0 0.0
        %1717 = vmatprep.subr.mxu0 0.0
        %1718 = vmatpush1.msra.mxu0 0.0
        %1719 = vmatprep.subr.mxu0 0.0
        %1720 = vmatpush1.msra.mxu0 0.0
        %1721 = vmatprep.subr.mxu0 0.0
        %1722 = vmatpush1.msra.mxu0 0.0
        %1723 = vmatprep.subr.mxu0 0.0
        %1724 = vmatpush1.msra.mxu0 0.0
        %1725 = vmatprep.subr.mxu0 0.0
        %1726 = vmatpush1.msra.mxu0 0.0
        %1727 = vmatprep.subr.mxu0 0.0
        %1728 = vmatpush1.msra.mxu0 0.0
        %1729 = vmatprep.subr.mxu0 0.0
        %1730 = vmatpush1.msra.mxu0 0.0
        %1731 = vmatprep.subr.mxu0 0.0
        %1732 = vmatpush1.msra.mxu0 0.0
        %1733 = vmatprep.subr.mxu0 0.0
        %1734 = vmatpush1.msra.mxu0 0.0
        %1735 = vmatprep.subr.mxu0 0.0
        %1736 = vmatpush1.msra.mxu0 0.0
        %1737 = vmatprep.subr.mxu0 0.0
        %1738 = vmatpush1.msra.mxu0 0.0
        %1739 = vmatprep.subr.mxu0 0.0
        %1740 = vmatpush1.msra.mxu0 0.0
        %1741 = vmatprep.subr.mxu0 0.0
        %1742 = vmatpush1.msra.mxu0 %v1418
        %1743 = vmatprep.subr.mxu0 0.0
        %1744 = vmatpush1.msra.mxu0 %v1417
        %1745 = vmatprep.subr.mxu0 0.0
        %1746 = vmatpush2.msra.mxu0 0.0
        %1747 = vmatprep.subr.mxu0 0.0
        %1748 = vmatpush2.msra.mxu0 0.0
        %1749 = vmatprep.subr.mxu0 0.0
        %1750 = vmatpush2.msra.mxu0 0.0
        %1751 = vmatprep.subr.mxu0 0.0
        %1752 = vmatpush2.msra.mxu0 0.0
        %1753 = vmatprep.subr.mxu0 0.0
        %1754 = vmatpush2.msra.mxu0 0.0
        %1755 = vmatprep.subr.mxu0 0.0
        %1756 = vmatpush2.msra.mxu0 0.0
        %1757 = vmatprep.subr.mxu0 0.0
        %1758 = vmatpush2.msra.mxu0 0.0
        %1759 = vmatprep.subr.mxu0 0.0
        %1760 = vmatpush2.msra.mxu0 0.0
        %1761 = vmatprep.subr.mxu0 0.0
        %1762 = vmatpush2.msra.mxu0 0.0
        %1763 = vmatprep.subr.mxu0 0.0
        %1764 = vmatpush2.msra.mxu0 0.0
        %1765 = vmatprep.subr.mxu0 0.0
        %1766 = vmatpush2.msra.mxu0 0.0
        %1767 = vmatprep.subr.mxu0 0.0
        %1768 = vmatpush2.msra.mxu0 0.0
        %1769 = vmatprep.subr.mxu0 0.0
        %1770 = vmatpush2.msra.mxu0 0.0
        %1771 = vmatprep.subr.mxu0 0.0
        %1772 = vmatpush2.msra.mxu0 0.0
        %1773 = vmatprep.subr.mxu0 0.0
        %1774 = vmatpush2.msra.mxu0 0.0
        %1775 = vmatprep.subr.mxu0 0.0
        %1776 = vmatpush2.msra.mxu0 0.0
        %1777 = vmatprep.mubr.f32.mxu0 0.0
        %1778 = vmatmul.mubr.f32.gmra.mxu0 %v524
        %v1779 = vpop.f32.mrf.mxu0
        %v1780 = vadd.f32 0.0, %v1779
        %v1781 = vpop.f32.mrf.mxu0
        %1782 = vdwg.mxu0
        %s1783 = scalar_lea.vmem [#allocation7], 160
        %v1784 = vld [vmem:[%s1783] sm:$0xff]
        %v1785 = vld [vmem:[%s1783 + $0x8] sm:$0xff]
        %v1787 = vsel %vm221, %v1780, 0
        %1789 = vmatprep.subr.mxu0 0.0
        %1790 = vmatpush1.msra.mxu0 0.0
        %1791 = vmatprep.subr.mxu0 0.0
        %1792 = vmatpush1.msra.mxu0 0.0
        %1793 = vmatprep.subr.mxu0 0.0
        %1794 = vmatpush1.msra.mxu0 0.0
        %1795 = vmatprep.subr.mxu0 0.0
        %1796 = vmatpush1.msra.mxu0 0.0
        %1797 = vmatprep.subr.mxu0 0.0
        %1798 = vmatpush1.msra.mxu0 0.0
        %1799 = vmatprep.subr.mxu0 0.0
        %1800 = vmatpush1.msra.mxu0 0.0
        %1801 = vmatprep.subr.mxu0 0.0
        %1802 = vmatpush1.msra.mxu0 0.0
        %1803 = vmatprep.subr.mxu0 0.0
        %1804 = vmatpush1.msra.mxu0 0.0
        %1805 = vmatprep.subr.mxu0 0.0
        %1806 = vmatpush1.msra.mxu0 0.0
        %1807 = vmatprep.subr.mxu0 0.0
        %1808 = vmatpush1.msra.mxu0 0.0
        %1809 = vmatprep.subr.mxu0 0.0
        %1810 = vmatpush1.msra.mxu0 0.0
        %1811 = vmatprep.subr.mxu0 0.0
        %1812 = vmatpush1.msra.mxu0 0.0
        %1813 = vmatprep.subr.mxu0 0.0
        %1814 = vmatpush1.msra.mxu0 0.0
        %1815 = vmatprep.subr.mxu0 0.0
        %1816 = vmatpush1.msra.mxu0 0.0
        %1817 = vmatprep.subr.mxu0 0.0
        %1818 = vmatpush1.msra.mxu0 %v1785
        %1819 = vmatprep.subr.mxu0 0.0
        %1820 = vmatpush1.msra.mxu0 %v1784
        %1821 = vmatprep.subr.mxu0 0.0
        %1822 = vmatpush2.msra.mxu0 0.0
        %1823 = vmatprep.subr.mxu0 0.0
        %1824 = vmatpush2.msra.mxu0 0.0
        %1825 = vmatprep.subr.mxu0 0.0
        %1826 = vmatpush2.msra.mxu0 0.0
        %1827 = vmatprep.subr.mxu0 0.0
        %1828 = vmatpush2.msra.mxu0 0.0
        %1829 = vmatprep.subr.mxu0 0.0
        %1830 = vmatpush2.msra.mxu0 0.0
        %1831 = vmatprep.subr.mxu0 0.0
        %1832 = vmatpush2.msra.mxu0 0.0
        %1833 = vmatprep.subr.mxu0 0.0
        %1834 = vmatpush2.msra.mxu0 0.0
        %1835 = vmatprep.subr.mxu0 0.0
        %1836 = vmatpush2.msra.mxu0 0.0
        %1837 = vmatprep.subr.mxu0 0.0
        %1838 = vmatpush2.msra.mxu0 0.0
        %1839 = vmatprep.subr.mxu0 0.0
        %1840 = vmatpush2.msra.mxu0 0.0
        %1841 = vmatprep.subr.mxu0 0.0
        %1842 = vmatpush2.msra.mxu0 0.0
        %1843 = vmatprep.subr.mxu0 0.0
        %1844 = vmatpush2.msra.mxu0 0.0
        %1845 = vmatprep.subr.mxu0 0.0
        %1846 = vmatpush2.msra.mxu0 0.0
        %1847 = vmatprep.subr.mxu0 0.0
        %1848 = vmatpush2.msra.mxu0 0.0
        %1849 = vmatprep.subr.mxu0 0.0
        %1850 = vmatpush2.msra.mxu0 0.0
        %1851 = vmatprep.subr.mxu0 0.0
        %1852 = vmatpush2.msra.mxu0 0.0
        %1853 = vmatprep.mubr.f32.mxu0 0.0
        %1854 = vmatmul.mubr.f32.gmra.mxu0 %v1787
        %v1855 = vpop.f32.mrf.mxu0
        %v1856 = vadd.f32 0.0, %v1855
        %v1857 = vpop.f32.mrf.mxu0
        %1858 = vdwg.mxu0
        %v1859 = vadd.f32 %v1712, %v1856
        %1860 = vmatprep.subr.mxu0 0.0
        %1861 = vmatpush1.msra.mxu0 0.0
        %1862 = vmatprep.subr.mxu0 0.0
        %1863 = vmatpush1.msra.mxu0 0.0
        %1864 = vmatprep.subr.mxu0 0.0
        %1865 = vmatpush1.msra.mxu0 0.0
        %1866 = vmatprep.subr.mxu0 0.0
        %1867 = vmatpush1.msra.mxu0 0.0
        %1868 = vmatprep.subr.mxu0 0.0
        %1869 = vmatpush1.msra.mxu0 0.0
        %1870 = vmatprep.subr.mxu0 0.0
        %1871 = vmatpush1.msra.mxu0 0.0
        %1872 = vmatprep.subr.mxu0 0.0
        %1873 = vmatpush1.msra.mxu0 0.0
        %1874 = vmatprep.subr.mxu0 0.0
        %1875 = vmatpush1.msra.mxu0 0.0
        %1876 = vmatprep.subr.mxu0 0.0
        %1877 = vmatpush1.msra.mxu0 0.0
        %1878 = vmatprep.subr.mxu0 0.0
        %1879 = vmatpush1.msra.mxu0 0.0
        %1880 = vmatprep.subr.mxu0 0.0
        %1881 = vmatpush1.msra.mxu0 0.0
        %1882 = vmatprep.subr.mxu0 0.0
        %1883 = vmatpush1.msra.mxu0 0.0
        %1884 = vmatprep.subr.mxu0 0.0
        %1885 = vmatpush1.msra.mxu0 0.0
        %1886 = vmatprep.subr.mxu0 0.0
        %1887 = vmatpush1.msra.mxu0 0.0
        %1888 = vmatprep.subr.mxu0 0.0
        %1889 = vmatpush1.msra.mxu0 %v1418
        %1890 = vmatprep.subr.mxu0 0.0
        %1891 = vmatpush1.msra.mxu0 %v1417
        %1892 = vmatprep.subr.mxu0 0.0
        %1893 = vmatpush2.msra.mxu0 0.0
        %1894 = vmatprep.subr.mxu0 0.0
        %1895 = vmatpush2.msra.mxu0 0.0
        %1896 = vmatprep.subr.mxu0 0.0
        %1897 = vmatpush2.msra.mxu0 0.0
        %1898 = vmatprep.subr.mxu0 0.0
        %1899 = vmatpush2.msra.mxu0 0.0
        %1900 = vmatprep.subr.mxu0 0.0
        %1901 = vmatpush2.msra.mxu0 0.0
        %1902 = vmatprep.subr.mxu0 0.0
        %1903 = vmatpush2.msra.mxu0 0.0
        %1904 = vmatprep.subr.mxu0 0.0
        %1905 = vmatpush2.msra.mxu0 0.0
        %1906 = vmatprep.subr.mxu0 0.0
        %1907 = vmatpush2.msra.mxu0 0.0
        %1908 = vmatprep.subr.mxu0 0.0
        %1909 = vmatpush2.msra.mxu0 0.0
        %1910 = vmatprep.subr.mxu0 0.0
        %1911 = vmatpush2.msra.mxu0 0.0
        %1912 = vmatprep.subr.mxu0 0.0
        %1913 = vmatpush2.msra.mxu0 0.0
        %1914 = vmatprep.subr.mxu0 0.0
        %1915 = vmatpush2.msra.mxu0 0.0
        %1916 = vmatprep.subr.mxu0 0.0
        %1917 = vmatpush2.msra.mxu0 0.0
        %1918 = vmatprep.subr.mxu0 0.0
        %1919 = vmatpush2.msra.mxu0 0.0
        %1920 = vmatprep.subr.mxu0 0.0
        %1921 = vmatpush2.msra.mxu0 0.0
        %1922 = vmatprep.subr.mxu0 0.0
        %1923 = vmatpush2.msra.mxu0 0.0
        %1924 = vmatprep.mubr.f32.mxu0 0.0
        %1925 = vmatmul.mubr.f32.gmra.mxu0 %v676
        %v1926 = vpop.f32.mrf.mxu0
        %v1927 = vadd.f32 0.0, %v1926
        %v1928 = vpop.f32.mrf.mxu0
        %1929 = vdwg.mxu0
        %s1930 = scalar_lea.vmem [#allocation7], 176
        %v1931 = vld [vmem:[%s1930] sm:$0xff]
        %v1932 = vld [vmem:[%s1930 + $0x8] sm:$0xff]
        %v1934 = vsel %vm221, %v1927, 0
        %1936 = vmatprep.subr.mxu0 0.0
        %1937 = vmatpush1.msra.mxu0 0.0
        %1938 = vmatprep.subr.mxu0 0.0
        %1939 = vmatpush1.msra.mxu0 0.0
        %1940 = vmatprep.subr.mxu0 0.0
        %1941 = vmatpush1.msra.mxu0 0.0
        %1942 = vmatprep.subr.mxu0 0.0
        %1943 = vmatpush1.msra.mxu0 0.0
        %1944 = vmatprep.subr.mxu0 0.0
        %1945 = vmatpush1.msra.mxu0 0.0
        %1946 = vmatprep.subr.mxu0 0.0
        %1947 = vmatpush1.msra.mxu0 0.0
        %1948 = vmatprep.subr.mxu0 0.0
        %1949 = vmatpush1.msra.mxu0 0.0
        %1950 = vmatprep.subr.mxu0 0.0
        %1951 = vmatpush1.msra.mxu0 0.0
        %1952 = vmatprep.subr.mxu0 0.0
        %1953 = vmatpush1.msra.mxu0 0.0
        %1954 = vmatprep.subr.mxu0 0.0
        %1955 = vmatpush1.msra.mxu0 0.0
        %1956 = vmatprep.subr.mxu0 0.0
        %1957 = vmatpush1.msra.mxu0 0.0
        %1958 = vmatprep.subr.mxu0 0.0
        %1959 = vmatpush1.msra.mxu0 0.0
        %1960 = vmatprep.subr.mxu0 0.0
        %1961 = vmatpush1.msra.mxu0 0.0
        %1962 = vmatprep.subr.mxu0 0.0
        %1963 = vmatpush1.msra.mxu0 0.0
        %1964 = vmatprep.subr.mxu0 0.0
        %1965 = vmatpush1.msra.mxu0 %v1932
        %1966 = vmatprep.subr.mxu0 0.0
        %1967 = vmatpush1.msra.mxu0 %v1931
        %1968 = vmatprep.subr.mxu0 0.0
        %1969 = vmatpush2.msra.mxu0 0.0
        %1970 = vmatprep.subr.mxu0 0.0
        %1971 = vmatpush2.msra.mxu0 0.0
        %1972 = vmatprep.subr.mxu0 0.0
        %1973 = vmatpush2.msra.mxu0 0.0
        %1974 = vmatprep.subr.mxu0 0.0
        %1975 = vmatpush2.msra.mxu0 0.0
        %1976 = vmatprep.subr.mxu0 0.0
        %1977 = vmatpush2.msra.mxu0 0.0
        %1978 = vmatprep.subr.mxu0 0.0
        %1979 = vmatpush2.msra.mxu0 0.0
        %1980 = vmatprep.subr.mxu0 0.0
        %1981 = vmatpush2.msra.mxu0 0.0
        %1982 = vmatprep.subr.mxu0 0.0
        %1983 = vmatpush2.msra.mxu0 0.0
        %1984 = vmatprep.subr.mxu0 0.0
        %1985 = vmatpush2.msra.mxu0 0.0
        %1986 = vmatprep.subr.mxu0 0.0
        %1987 = vmatpush2.msra.mxu0 0.0
        %1988 = vmatprep.subr.mxu0 0.0
        %1989 = vmatpush2.msra.mxu0 0.0
        %1990 = vmatprep.subr.mxu0 0.0
        %1991 = vmatpush2.msra.mxu0 0.0
        %1992 = vmatprep.subr.mxu0 0.0
        %1993 = vmatpush2.msra.mxu0 0.0
        %1994 = vmatprep.subr.mxu0 0.0
        %1995 = vmatpush2.msra.mxu0 0.0
        %1996 = vmatprep.subr.mxu0 0.0
        %1997 = vmatpush2.msra.mxu0 0.0
        %1998 = vmatprep.subr.mxu0 0.0
        %1999 = vmatpush2.msra.mxu0 0.0
        %2000 = vmatprep.mubr.f32.mxu0 0.0
        %2001 = vmatmul.mubr.f32.gmra.mxu0 %v1934
        %v2002 = vpop.f32.mrf.mxu0
        %v2003 = vadd.f32 0.0, %v2002
        %v2004 = vpop.f32.mrf.mxu0
        %2005 = vdwg.mxu0
        %v2006 = vadd.f32 %v1859, %v2003
        %2007 = vst [vmem:[%s217] sm:$0xf] %v2006
        %s2008 = sand.u32 %s97, 1
        %s2009 = scalar_lea.sflag [#allocation4], %s2008
        %s2010 = sand.u32 %s97, 1
        %s2011 = smul.addr %s2010, 4
        %s2012 = scalar_lea.vmem [#allocation8], %s2011
        // Predicated region
        $region45: #{tpu_custom_call.1} parent=31 // pred_check
          %p2013 = pneg %p107
        $region46: #{tpu_custom_call.1} parent=31 // pred_check_branch
          %2015 = sbr.rel (%p2013) target = $region48
        $region47: #{tpu_custom_call.1} parent=31 // pred_region
          %s2017 = ssub.s32 64, 64
          %2018 = vsyncadd %s2009, %s2017
          %s2019 = smul.addr %s21, 64
          %s2020 = scalar_lea.hbm %s3, %s2019
          %s2022 = sshll.u32 %s2012, 4
          %s2023 = int_to_ptr.vmem [resolvable:$true] %s2022
          %2025 = dma.vmem_to_hbm [thread:$0]  %s2023, 64, %s2020, %s2009
        $region48: #{tpu_custom_call.1} parent=31 // pred_fallthru
          _
      $region32: #{tpu_custom_call.1} parent=5 // pred_fallthru
        _
      %p2026 = scmp.le.s32.totalorder 2, %s16
      // Predicated region
      $region49: #{tpu_custom_call.1} parent=5 // pred_check
        %p2027 = pneg %p2026
      $region50: #{tpu_custom_call.1} parent=5 // pred_check_branch
        %2029 = sbr.rel (%p2027) target = $region52
      $region51: #{tpu_custom_call.1} parent=5 // pred_region
        %s2030 = ssub.s32 %s16, 2
        // Predicated region
        $region53: #{tpu_custom_call.1} parent=51 // pred_check
          %p2031 = pneg %p113
        $region54: #{tpu_custom_call.1} parent=51 // pred_check_branch
          %2033 = sbr.rel (%p2031) target = $region56
        $region55: #{tpu_custom_call.1} parent=51 // pred_region
          %s2034 = sand.u32 %s98, 1
          %s2035 = scalar_lea.sflag [#allocation4], %s2034
          %s2036 = sand.u32 %s98, 1
          %s2037 = smul.addr %s2036, 4
          %s2038 = scalar_lea.vmem [#allocation8], %s2037
          %2039 = dma.done %s2035, 64
        $region56: #{tpu_custom_call.1} parent=51 // pred_fallthru
          _
      $region52: #{tpu_custom_call.1} parent=5 // pred_fallthru
        _
    $region6: #{tpu_custom_call.1} parent=1 // loop_footer
      %s20 = sadd.s32 1, %s16
    $region7: #{tpu_custom_call.1} parent=1 // loop_footer_branch
      %15 = sbr.rel target = $region3
    $region8: #{tpu_custom_call.1} parent=1 // loop_exit
      _
    %2040 = vsyncpa [#allocation3], 1
    %s2041 = scalar_lea.sflag [#allocation3], 1
    %2042 = vsyncpa %s2041, 1
    %2043 = vsyncpa [#allocation6], 1
    %2044 = vsyncpa [#allocation4], 1
    %s2045 = scalar_lea.sflag [#allocation4], 1
    %2046 = vsyncpa %s2045, 1

</llo_original>
